<compile_context>
chip_gen: v7x
topology: tpu7x:2x2x1
jax: 0.10.0
libtpu: 0.0.40
codegen_flags: <defaults>
</compile_context>

<pallas_src>
import functools
import math

import jax
import jax.numpy as jnp
import numpy as np
from jax.experimental import pallas as pl
from jax.experimental.pallas import tpu as pltpu


def _mha_kernel(*refs, num_heads, has_bias, compute_dtype):
    """One batch tile (nb elements) per grid step. All matmuls hit the MXU."""
    if has_bias:
        (q_ref, k_ref, v_ref, bias_ref,
         wq_ref, bq_ref, wk_ref, bk_ref, wv_ref, bv_ref,
         wp_ref, bp_ref, out_ref) = refs
    else:
        (q_ref, k_ref, v_ref,
         wq_ref, bq_ref, wk_ref, bk_ref, wv_ref, bv_ref,
         wp_ref, bp_ref, out_ref) = refs
        bias_ref = None

    nb, S, E = q_ref.shape
    _, T, _ = k_ref.shape
    hd = E // num_heads

    # ---- Hoisted projections: ONE (nb*S, E) @ (E, E) matmul per weight per grid step ----
    # (wrapper guarantees nb > 1 only when S, T are sublane multiples, so these reshapes
    #  are cheap dim merges; for nb == 1 they are pure squeezes).
    q2 = q_ref[...].reshape(nb * S, E)          # compute_dtype
    k2 = k_ref[...].reshape(nb * T, E)
    v2 = v_ref[...].reshape(nb * T, E)

    Q = jnp.dot(q2, wq_ref[...], preferred_element_type=jnp.float32) + bq_ref[...]  # pre-scaled
    K = jnp.dot(k2, wk_ref[...], preferred_element_type=jnp.float32) + bk_ref[...]
    V = jnp.dot(v2, wv_ref[...], preferred_element_type=jnp.float32) + bv_ref[...]

    Qc = Q.astype(compute_dtype).reshape(nb, S, E)
    Kc = K.astype(compute_dtype).reshape(nb, T, E)
    Vc = V.astype(compute_dtype).reshape(nb, T, E)

    wp = wp_ref[...]                            # (E, E) bf16, pre-transposed (in, out)
    bias = bias_ref[...] if has_bias else None  # (S, T) additive f32 mask bias

    def head_out(h):
        """Attention for head h over the whole batch tile -> (nb*S, hd) in compute_dtype."""
        lo = h * hd
        qh = Qc[:, :, lo:lo + hd]               # (nb, S, hd)
        kh = Kc[:, :, lo:lo + hd]               # (nb, T, hd)
        vh = Vc[:, :, lo:lo + hd]               # (nb, T, hd)

        # Batched Q.K^T: contract head_dim of both operands, batch over nb.
        s = jnp.einsum("bsd,btd->bst", qh, kh,
                       preferred_element_type=jnp.float32)              # (nb, S, T) f32
        if has_bias:
            s = s + bias                        # broadcast additive mask

        # Numerically-stable softmax, normalization deferred past the V matmul.
        s = s - jnp.max(s, axis=-1, keepdims=True)
        p = jnp.exp(s)                          # unnormalized probabilities
        inv = pl.reciprocal(jnp.sum(p, axis=-1, keepdims=True), approx=True)  # (nb, S, 1)

        # TODO(synk): attn_drop is eval-mode identity here (no training dropout).
        o = jnp.einsum("bst,btd->bsd", p.astype(compute_dtype), vh,
                       preferred_element_type=jnp.float32)              # (nb, S, hd) f32
        o = o * inv                             # scale S*hd elems instead of S*T
        return o.reshape(nb * S, hd).astype(compute_dtype)

    if hd % 128 == 0:
        # Lane-aligned heads: cheap concatenate, one full-depth output projection.
        o_all = jnp.concatenate([head_out(h) for h in range(num_heads)], axis=-1)
        out = jnp.dot(o_all, wp, preferred_element_type=jnp.float32) + bp_ref[...]
    else:
        # Sub-128-lane heads: accumulate the output projection per head instead of doing
        # masked column stores into a merge slab.
        acc = jnp.zeros((nb * S, E), jnp.float32)
        for h in range(num_heads):
            lo = h * hd
            acc = acc + jnp.dot(head_out(h), wp[lo:lo + hd, :],
                                preferred_element_type=jnp.float32)
        out = acc + bp_ref[...]

    out_ref[...] = out.reshape(nb, S, E).astype(out_ref.dtype)


def _vmem_capacity_bytes():
    """Per-core VMEM capacity, with a conservative fallback (v7x = 64 MiB)."""
    try:
        info = pltpu.get_tpu_info()
        cap = getattr(info, "vmem_capacity_bytes", None)
        if cap:
            return int(cap)
    except Exception:
        pass
    return 64 * 1024 * 1024


def _pick_batch_block(N, S, T, E, vmem_capacity, max_block=16):
    """Largest divisor of N whose per-step working set fits a capacity-derived budget.

    Keeps at least 2 grid steps (so the 'parallel' axis can be split across TensorCores)
    and only merges batch elements when S, T are sublane multiples (cheap reshapes).
    """
    if S % 8 != 0 or T % 8 != 0:
        return 1
    budget = max(vmem_capacity // 16, 2 * 1024 * 1024)   # ~8 MiB on 128 MiB parts, ~4 MiB on v7x
    per_elem = 4 * (3 * (S + 2 * T) * E + 2 * S * T + 2 * S * E)  # rough f32-equivalent bytes
    nb = 1
    for cand in range(2, min(N, max_block) + 1):
        if N % cand != 0:
            continue
        if cand * per_elem > budget:
            continue
        if N >= 2 and N // cand < 2:
            continue   # keep >= 2 grid steps so both TCs get work
        nb = cand
    return nb


def multi_head_attention(query, key, value, params, num_heads, attn_mask=None,
                         *, batch_block=None, compute_dtype=jnp.bfloat16):
    """Pallas implementation of MultiHeadAttention.forward (eval mode)."""
    N, S, E = query.shape
    _, T, _ = value.shape
    head_dim = E // num_heads
    out_dtype = query.dtype
    scale = 1.0 / math.sqrt(head_dim)
    f32 = jnp.float32

    # One-time wrapper-side layout work:
    #  - pre-transpose nn.Linear weights (out,in) -> (in,out) so the kernel never transposes,
    #  - fold the 1/sqrt(head_dim) scale into the query projection,
    #  - cast MXU weight operands to bf16 (biases stay f32, added post-accumulate).
    wq_t = (params["wq"].astype(f32).T * scale).astype(compute_dtype)
    wk_t = params["wk"].astype(f32).T.astype(compute_dtype)
    wv_t = params["wv"].astype(f32).T.astype(compute_dtype)
    wp_t = params["wp"].astype(f32).T.astype(compute_dtype)
    bq = (params["bq"].astype(f32) * scale).reshape(1, E)
    bk = params["bk"].astype(f32).reshape(1, E)
    bv = params["bv"].astype(f32).reshape(1, E)
    bp = params["bp"].astype(f32).reshape(1, E)

    has_bias = attn_mask is not None

    # Activations as bf16 MXU operands (halves DMA traffic / VMEM); math stays f32 in-kernel.
    q_in = query.astype(compute_dtype)
    k_in = key.astype(compute_dtype)
    v_in = value.astype(compute_dtype)

    vmem_cap = _vmem_capacity_bytes()
    if batch_block is None:
        batch_block = _pick_batch_block(N, S, T, E, vmem_cap)
    nb = batch_block
    assert N % nb == 0, "batch_block must divide N"

    kernel = functools.partial(_mha_kernel, num_heads=num_heads,
                               has_bias=has_bias, compute_dtype=compute_dtype)

    const2 = lambda n: (0, 0)
    in_specs = [
        pl.BlockSpec((nb, S, E), lambda n: (n, 0, 0)),   # query
        pl.BlockSpec((nb, T, E), lambda n: (n, 0, 0)),   # key
        pl.BlockSpec((nb, T, E), lambda n: (n, 0, 0)),   # value
    ]
    operands = [q_in, k_in, v_in]
    if has_bias:
        # Additive mask bias computed once: 0 where attend, -1e10 where mask == 0.
        bias = jnp.where(attn_mask == 0, jnp.float32(-1e10), jnp.float32(0.0))
        in_specs.append(pl.BlockSpec((S, T), const2))
        operands.append(bias)
    in_specs += [
        pl.BlockSpec((E, E), const2), pl.BlockSpec((1, E), const2),   # Wq^T, bq
        pl.BlockSpec((E, E), const2), pl.BlockSpec((1, E), const2),   # Wk^T, bk
        pl.BlockSpec((E, E), const2), pl.BlockSpec((1, E), const2),   # Wv^T, bv
        pl.BlockSpec((E, E), const2), pl.BlockSpec((1, E), const2),   # Wp^T, bp
    ]
    operands += [wq_t, bq, wk_t, bk, wv_t, bv, wp_t, bp]

    grid_spec = pltpu.PrefetchScalarGridSpec(
        num_scalar_prefetch=0,
        grid=(N // nb,),
        in_specs=in_specs,
        out_specs=pl.BlockSpec((nb, S, E), lambda n: (n, 0, 0)),
    )

    # VMEM budget derived from hardware capacity (75%), leaving Mosaic scratch headroom.
    vmem_limit = int(min(vmem_cap * 3 // 4, 112 * 1024 * 1024))

    return pl.pallas_call(
        kernel,
        out_shape=jax.ShapeDtypeStruct((N, S, E), out_dtype),
        grid_spec=grid_spec,
        compiler_params=pltpu.CompilerParams(
            dimension_semantics=("parallel",),
            vmem_limit_bytes=vmem_limit,
        ),
    )(*operands)


def _reference(query, key, value, params, num_heads, attn_mask=None):
    """Pure-JAX f32 reference mirroring the PyTorch forward (eval mode)."""
    N, S, E = query.shape
    _, T, _ = value.shape
    hd = E // num_heads

    def lin(x, w, b):
        return jnp.einsum("nse,oe->nso", x, w) + b

    K = lin(key, params["wk"], params["bk"]).reshape(N, T, num_heads, hd).transpose(0, 2, 1, 3)
    V = lin(value, params["wv"], params["bv"]).reshape(N, T, num_heads, hd).transpose(0, 2, 1, 3)
    Q = lin(query, params["wq"], params["bq"]).reshape(N, S, num_heads, hd).transpose(0, 2, 1, 3)

    s = jnp.einsum("nhsd,nhtd->nhst", Q, K) / jnp.sqrt(jnp.float32(hd))
    if attn_mask is not None:
        s = jnp.where(attn_mask == 0, -1e10, s)
    p = jax.nn.softmax(s, axis=-1)
    o = jnp.einsum("nhst,nhtd->nhsd", p, V)
    o = o.transpose(0, 2, 1, 3).reshape(N, S, E)
    return lin(o, params["wp"], params["bp"])


if __name__ == "__main__":
    # Small shapes consistent with the module's forward: (N, S, E) / (N, T, E)
    N, S, T, E, H = 2, 8, 8, 32, 4

    key0 = jax.random.PRNGKey(0)
    ks = jax.random.split(key0, 12)
    scale = 1.0 / math.sqrt(E)

    params = {
        "wq": jax.random.uniform(ks[0], (E, E), jnp.float32, -scale, scale),
        "bq": jax.random.uniform(ks[1], (E,), jnp.float32, -scale, scale),
        "wk": jax.random.uniform(ks[2], (E, E), jnp.float32, -scale, scale),
        "bk": jax.random.uniform(ks[3], (E,), jnp.float32, -scale, scale),
        "wv": jax.random.uniform(ks[4], (E, E), jnp.float32, -scale, scale),
        "bv": jax.random.uniform(ks[5], (E,), jnp.float32, -scale, scale),
        "wp": jax.random.uniform(ks[6], (E, E), jnp.float32, -scale, scale),
        "bp": jax.random.uniform(ks[7], (E,), jnp.float32, -scale, scale),
    }

    query = jax.random.normal(ks[8], (N, S, E), jnp.float32)
    key_in = jax.random.normal(ks[9], (N, T, E), jnp.float32)
    value = jax.random.normal(ks[10], (N, T, E), jnp.float32)

    # Causal-style mask: mask[i, j] == 0 means "do not attend".
    attn_mask = (jnp.tril(jnp.ones((S, T), jnp.int32)) > 0).astype(jnp.int32)

    # Masked path.
    out_m = jax.block_until_ready(multi_head_attention(query, key_in, value, params, H, attn_mask))
    ref_m = _reference(query, key_in, value, params, H, attn_mask)
    np.testing.assert_allclose(np.asarray(out_m), np.asarray(ref_m), rtol=5e-2, atol=5e-2)

    # Unmasked path (compiles the no-bias kernel variant).
    out_u = jax.block_until_ready(multi_head_attention(query, key_in, value, params, H, None))
    ref_u = _reference(query, key_in, value, params, H, None)
    np.testing.assert_allclose(np.asarray(out_u), np.asarray(ref_u), rtol=5e-2, atol=5e-2)

    print("KERNEL_OK")
</pallas_src>

<mosaic_0001>
module attributes {stable_mosaic.version = 11 : i64} {
  func.func @_mha_kernel(%arg0: i32, %arg1: memref<1x8x32xbf16, #tpu.memory_space<vmem>>, %arg2: memref<1x8x32xbf16, #tpu.memory_space<vmem>>, %arg3: memref<1x8x32xbf16, #tpu.memory_space<vmem>>, %arg4: memref<8x8xf32, #tpu.memory_space<vmem>>, %arg5: memref<32x32xbf16, #tpu.memory_space<vmem>>, %arg6: memref<1x32xf32, #tpu.memory_space<vmem>>, %arg7: memref<32x32xbf16, #tpu.memory_space<vmem>>, %arg8: memref<1x32xf32, #tpu.memory_space<vmem>>, %arg9: memref<32x32xbf16, #tpu.memory_space<vmem>>, %arg10: memref<1x32xf32, #tpu.memory_space<vmem>>, %arg11: memref<32x32xbf16, #tpu.memory_space<vmem>>, %arg12: memref<1x32xf32, #tpu.memory_space<vmem>>, %arg13: memref<1x8x32xf32, #tpu.memory_space<vmem>>) attributes {dimension_semantics = [#tpu.dimension_semantics<parallel>], iteration_bounds = array<i64: 2>, scalar_prefetch = 0 : i64, scratch_operands = 0 : i64, tpu.core_type = #tpu.core_type<tc>, window_params = [{transform_indices = @transform_0, window_bounds = array<i64: 1, 8, 32>}, {transform_indices = @transform_1, window_bounds = array<i64: 1, 8, 32>}, {transform_indices = @transform_2, window_bounds = array<i64: 1, 8, 32>}, {pipeline_mode = #tpu.pipeline_mode<synchronous>, transform_indices = @transform_3, window_bounds = array<i64: 8, 8>}, {pipeline_mode = #tpu.pipeline_mode<synchronous>, transform_indices = @transform_4, window_bounds = array<i64: 32, 32>}, {pipeline_mode = #tpu.pipeline_mode<synchronous>, transform_indices = @transform_5, window_bounds = array<i64: 1, 32>}, {pipeline_mode = #tpu.pipeline_mode<synchronous>, transform_indices = @transform_6, window_bounds = array<i64: 32, 32>}, {pipeline_mode = #tpu.pipeline_mode<synchronous>, transform_indices = @transform_7, window_bounds = array<i64: 1, 32>}, {pipeline_mode = #tpu.pipeline_mode<synchronous>, transform_indices = @transform_8, window_bounds = array<i64: 32, 32>}, {pipeline_mode = #tpu.pipeline_mode<synchronous>, transform_indices = @transform_9, window_bounds = array<i64: 1, 32>}, {pipeline_mode = #tpu.pipeline_mode<synchronous>, transform_indices = @transform_10, window_bounds = array<i64: 32, 32>}, {pipeline_mode = #tpu.pipeline_mode<synchronous>, transform_indices = @transform_11, window_bounds = array<i64: 1, 32>}, {transform_indices = @transform_12, window_bounds = array<i64: 1, 8, 32>}]} {
    %c0 = arith.constant 0 : index
    %c0_0 = arith.constant 0 : index
    %c0_1 = arith.constant 0 : index
    %0 = vector.load %arg1[%c0, %c0_0, %c0_1] : memref<1x8x32xbf16, #tpu.memory_space<vmem>>, vector<1x8x32xbf16>
    %1 = vector.shape_cast %0 : vector<1x8x32xbf16> to vector<8x32xbf16>
    %c0_2 = arith.constant 0 : index
    %c0_3 = arith.constant 0 : index
    %c0_4 = arith.constant 0 : index
    %2 = vector.load %arg2[%c0_2, %c0_3, %c0_4] : memref<1x8x32xbf16, #tpu.memory_space<vmem>>, vector<1x8x32xbf16>
    %3 = vector.shape_cast %2 : vector<1x8x32xbf16> to vector<8x32xbf16>
    %c0_5 = arith.constant 0 : index
    %c0_6 = arith.constant 0 : index
    %c0_7 = arith.constant 0 : index
    %4 = vector.load %arg3[%c0_5, %c0_6, %c0_7] : memref<1x8x32xbf16, #tpu.memory_space<vmem>>, vector<1x8x32xbf16>
    %5 = vector.shape_cast %4 : vector<1x8x32xbf16> to vector<8x32xbf16>
    %c0_8 = arith.constant 0 : index
    %c0_9 = arith.constant 0 : index
    %6 = vector.load %arg5[%c0_8, %c0_9] : memref<32x32xbf16, #tpu.memory_space<vmem>>, vector<32x32xbf16>
    %cst = arith.constant dense<0.000000e+00> : vector<8x32xf32>
    %7 = tpu.matmul %1, %6, %cst {dimension_numbers = #tpu.dot_dimension_numbers<[1], [0], [0], [1], [0, 0, 1, 1], [], []>} : vector<8x32xbf16>, vector<32x32xbf16>, vector<8x32xf32> -> vector<8x32xf32>
    %c0_10 = arith.constant 0 : index
    %c0_11 = arith.constant 0 : index
    %8 = vector.load %arg6[%c0_10, %c0_11] : memref<1x32xf32, #tpu.memory_space<vmem>>, vector<1x32xf32>
    %9 = vector.broadcast %8 : vector<1x32xf32> to vector<8x32xf32>
    %10 = arith.addf %7, %9 : vector<8x32xf32>
    %c0_12 = arith.constant 0 : index
    %c0_13 = arith.constant 0 : index
    %11 = vector.load %arg7[%c0_12, %c0_13] : memref<32x32xbf16, #tpu.memory_space<vmem>>, vector<32x32xbf16>
    %cst_14 = arith.constant dense<0.000000e+00> : vector<8x32xf32>
    %12 = tpu.matmul %3, %11, %cst_14 {dimension_numbers = #tpu.dot_dimension_numbers<[1], [0], [0], [1], [0, 0, 1, 1], [], []>} : vector<8x32xbf16>, vector<32x32xbf16>, vector<8x32xf32> -> vector<8x32xf32>
    %c0_15 = arith.constant 0 : index
    %c0_16 = arith.constant 0 : index
    %13 = vector.load %arg8[%c0_15, %c0_16] : memref<1x32xf32, #tpu.memory_space<vmem>>, vector<1x32xf32>
    %14 = vector.broadcast %13 : vector<1x32xf32> to vector<8x32xf32>
    %15 = arith.addf %12, %14 : vector<8x32xf32>
    %c0_17 = arith.constant 0 : index
    %c0_18 = arith.constant 0 : index
    %16 = vector.load %arg9[%c0_17, %c0_18] : memref<32x32xbf16, #tpu.memory_space<vmem>>, vector<32x32xbf16>
    %cst_19 = arith.constant dense<0.000000e+00> : vector<8x32xf32>
    %17 = tpu.matmul %5, %16, %cst_19 {dimension_numbers = #tpu.dot_dimension_numbers<[1], [0], [0], [1], [0, 0, 1, 1], [], []>} : vector<8x32xbf16>, vector<32x32xbf16>, vector<8x32xf32> -> vector<8x32xf32>
    %c0_20 = arith.constant 0 : index
    %c0_21 = arith.constant 0 : index
    %18 = vector.load %arg10[%c0_20, %c0_21] : memref<1x32xf32, #tpu.memory_space<vmem>>, vector<1x32xf32>
    %19 = vector.broadcast %18 : vector<1x32xf32> to vector<8x32xf32>
    %20 = arith.addf %17, %19 : vector<8x32xf32>
    %21 = arith.truncf %10 : vector<8x32xf32> to vector<8x32xbf16>
    %22 = vector.shape_cast %21 : vector<8x32xbf16> to vector<1x8x32xbf16>
    %23 = arith.truncf %15 : vector<8x32xf32> to vector<8x32xbf16>
    %24 = vector.shape_cast %23 : vector<8x32xbf16> to vector<1x8x32xbf16>
    %25 = arith.truncf %20 : vector<8x32xf32> to vector<8x32xbf16>
    %26 = vector.shape_cast %25 : vector<8x32xbf16> to vector<1x8x32xbf16>
    %c0_22 = arith.constant 0 : index
    %c0_23 = arith.constant 0 : index
    %27 = vector.load %arg11[%c0_22, %c0_23] : memref<32x32xbf16, #tpu.memory_space<vmem>>, vector<32x32xbf16>
    %c0_24 = arith.constant 0 : index
    %c0_25 = arith.constant 0 : index
    %28 = vector.load %arg4[%c0_24, %c0_25] : memref<8x8xf32, #tpu.memory_space<vmem>>, vector<8x8xf32>
    %cst_26 = arith.constant 0.000000e+00 : f32
    %29 = vector.broadcast %cst_26 : f32 to vector<8x32xf32>
    %30 = vector.extract_strided_slice %22 {offsets = [0, 0, 0], sizes = [1, 8, 8], strides = [1, 1, 1]} : vector<1x8x32xbf16> to vector<1x8x8xbf16>
    %31 = vector.extract_strided_slice %24 {offsets = [0, 0, 0], sizes = [1, 8, 8], strides = [1, 1, 1]} : vector<1x8x32xbf16> to vector<1x8x8xbf16>
    %32 = vector.extract_strided_slice %26 {offsets = [0, 0, 0], sizes = [1, 8, 8], strides = [1, 1, 1]} : vector<1x8x32xbf16> to vector<1x8x8xbf16>
    "tpu.trace_start"() <{level = 10 : i32, message = "bsd,btd->bst"}> : () -> ()
    %cst_27 = arith.constant dense<0.000000e+00> : vector<1x8x8xf32>
    %33 = tpu.matmul %30, %31, %cst_27 {dimension_numbers = #tpu.dot_dimension_numbers<[2], [2], [1], [1], [0, 0, 0, 1, 1, 1], [0], [0]>} : vector<1x8x8xbf16>, vector<1x8x8xbf16>, vector<1x8x8xf32> -> vector<1x8x8xf32>
    "tpu.trace_stop"() : () -> ()
    %34 = vector.shape_cast %28 : vector<8x8xf32> to vector<1x8x8xf32>
    %35 = arith.addf %33, %34 : vector<1x8x8xf32>
    %cst_28 = arith.constant dense<0xFF800000> : vector<1x8xf32>
    %36 = vector.multi_reduction <maximumf>, %35, %cst_28 [2] : vector<1x8x8xf32> to vector<1x8xf32>
    %37 = vector.shape_cast %36 : vector<1x8xf32> to vector<1x8x1xf32>
    %38 = vector.broadcast %37 : vector<1x8x1xf32> to vector<1x8x8xf32>
    %39 = arith.subf %35, %38 : vector<1x8x8xf32>
    %40 = math.exp %39 : vector<1x8x8xf32>
    %cst_29 = arith.constant dense<0.000000e+00> : vector<1x8xf32>
    %41 = vector.multi_reduction <add>, %40, %cst_29 [2] : vector<1x8x8xf32> to vector<1x8xf32>
    %42 = vector.shape_cast %41 : vector<1x8xf32> to vector<1x8x1xf32>
    %43 = tpu.reciprocal %42 {approx = true} : vector<1x8x1xf32> -> vector<1x8x1xf32>
    %44 = arith.truncf %40 : vector<1x8x8xf32> to vector<1x8x8xbf16>
    "tpu.trace_start"() <{level = 10 : i32, message = "bst,btd->bsd"}> : () -> ()
    %cst_30 = arith.constant dense<0.000000e+00> : vector<1x8x8xf32>
    %45 = tpu.matmul %44, %32, %cst_30 {dimension_numbers = #tpu.dot_dimension_numbers<[2], [1], [1], [2], [0, 0, 0, 1, 1, 2], [0], [0]>} : vector<1x8x8xbf16>, vector<1x8x8xbf16>, vector<1x8x8xf32> -> vector<1x8x8xf32>
    "tpu.trace_stop"() : () -> ()
    %46 = vector.broadcast %43 : vector<1x8x1xf32> to vector<1x8x8xf32>
    %47 = arith.mulf %45, %46 : vector<1x8x8xf32>
    %48 = vector.shape_cast %47 : vector<1x8x8xf32> to vector<8x8xf32>
    %49 = arith.truncf %48 : vector<8x8xf32> to vector<8x8xbf16>
    %50 = vector.extract_strided_slice %27 {offsets = [0, 0], sizes = [8, 32], strides = [1, 1]} : vector<32x32xbf16> to vector<8x32xbf16>
    %cst_31 = arith.constant dense<0.000000e+00> : vector<8x32xf32>
    %51 = tpu.matmul %49, %50, %cst_31 {dimension_numbers = #tpu.dot_dimension_numbers<[1], [0], [0], [1], [0, 0, 1, 1], [], []>} : vector<8x8xbf16>, vector<8x32xbf16>, vector<8x32xf32> -> vector<8x32xf32>
    %52 = arith.addf %29, %51 : vector<8x32xf32>
    %53 = vector.extract_strided_slice %22 {offsets = [0, 0, 8], sizes = [1, 8, 8], strides = [1, 1, 1]} : vector<1x8x32xbf16> to vector<1x8x8xbf16>
    %54 = vector.extract_strided_slice %24 {offsets = [0, 0, 8], sizes = [1, 8, 8], strides = [1, 1, 1]} : vector<1x8x32xbf16> to vector<1x8x8xbf16>
    %55 = vector.extract_strided_slice %26 {offsets = [0, 0, 8], sizes = [1, 8, 8], strides = [1, 1, 1]} : vector<1x8x32xbf16> to vector<1x8x8xbf16>
    "tpu.trace_start"() <{level = 10 : i32, message = "bsd,btd->bst"}> : () -> ()
    %cst_32 = arith.constant dense<0.000000e+00> : vector<1x8x8xf32>
    %56 = tpu.matmul %53, %54, %cst_32 {dimension_numbers = #tpu.dot_dimension_numbers<[2], [2], [1], [1], [0, 0, 0, 1, 1, 1], [0], [0]>} : vector<1x8x8xbf16>, vector<1x8x8xbf16>, vector<1x8x8xf32> -> vector<1x8x8xf32>
    "tpu.trace_stop"() : () -> ()
    %57 = vector.shape_cast %28 : vector<8x8xf32> to vector<1x8x8xf32>
    %58 = arith.addf %56, %57 : vector<1x8x8xf32>
    %cst_33 = arith.constant dense<0xFF800000> : vector<1x8xf32>
    %59 = vector.multi_reduction <maximumf>, %58, %cst_33 [2] : vector<1x8x8xf32> to vector<1x8xf32>
    %60 = vector.shape_cast %59 : vector<1x8xf32> to vector<1x8x1xf32>
    %61 = vector.broadcast %60 : vector<1x8x1xf32> to vector<1x8x8xf32>
    %62 = arith.subf %58, %61 : vector<1x8x8xf32>
    %63 = math.exp %62 : vector<1x8x8xf32>
    %cst_34 = arith.constant dense<0.000000e+00> : vector<1x8xf32>
    %64 = vector.multi_reduction <add>, %63, %cst_34 [2] : vector<1x8x8xf32> to vector<1x8xf32>
    %65 = vector.shape_cast %64 : vector<1x8xf32> to vector<1x8x1xf32>
    %66 = tpu.reciprocal %65 {approx = true} : vector<1x8x1xf32> -> vector<1x8x1xf32>
    %67 = arith.truncf %63 : vector<1x8x8xf32> to vector<1x8x8xbf16>
    "tpu.trace_start"() <{level = 10 : i32, message = "bst,btd->bsd"}> : () -> ()
    %cst_35 = arith.constant dense<0.000000e+00> : vector<1x8x8xf32>
    %68 = tpu.matmul %67, %55, %cst_35 {dimension_numbers = #tpu.dot_dimension_numbers<[2], [1], [1], [2], [0, 0, 0, 1, 1, 2], [0], [0]>} : vector<1x8x8xbf16>, vector<1x8x8xbf16>, vector<1x8x8xf32> -> vector<1x8x8xf32>
    "tpu.trace_stop"() : () -> ()
    %69 = vector.broadcast %66 : vector<1x8x1xf32> to vector<1x8x8xf32>
    %70 = arith.mulf %68, %69 : vector<1x8x8xf32>
    %71 = vector.shape_cast %70 : vector<1x8x8xf32> to vector<8x8xf32>
    %72 = arith.truncf %71 : vector<8x8xf32> to vector<8x8xbf16>
    %73 = vector.extract_strided_slice %27 {offsets = [8, 0], sizes = [8, 32], strides = [1, 1]} : vector<32x32xbf16> to vector<8x32xbf16>
    %cst_36 = arith.constant dense<0.000000e+00> : vector<8x32xf32>
    %74 = tpu.matmul %72, %73, %cst_36 {dimension_numbers = #tpu.dot_dimension_numbers<[1], [0], [0], [1], [0, 0, 1, 1], [], []>} : vector<8x8xbf16>, vector<8x32xbf16>, vector<8x32xf32> -> vector<8x32xf32>
    %75 = arith.addf %52, %74 : vector<8x32xf32>
    %76 = vector.extract_strided_slice %22 {offsets = [0, 0, 16], sizes = [1, 8, 8], strides = [1, 1, 1]} : vector<1x8x32xbf16> to vector<1x8x8xbf16>
    %77 = vector.extract_strided_slice %24 {offsets = [0, 0, 16], sizes = [1, 8, 8], strides = [1, 1, 1]} : vector<1x8x32xbf16> to vector<1x8x8xbf16>
    %78 = vector.extract_strided_slice %26 {offsets = [0, 0, 16], sizes = [1, 8, 8], strides = [1, 1, 1]} : vector<1x8x32xbf16> to vector<1x8x8xbf16>
    "tpu.trace_start"() <{level = 10 : i32, message = "bsd,btd->bst"}> : () -> ()
    %cst_37 = arith.constant dense<0.000000e+00> : vector<1x8x8xf32>
    %79 = tpu.matmul %76, %77, %cst_37 {dimension_numbers = #tpu.dot_dimension_numbers<[2], [2], [1], [1], [0, 0, 0, 1, 1, 1], [0], [0]>} : vector<1x8x8xbf16>, vector<1x8x8xbf16>, vector<1x8x8xf32> -> vector<1x8x8xf32>
    "tpu.trace_stop"() : () -> ()
    %80 = vector.shape_cast %28 : vector<8x8xf32> to vector<1x8x8xf32>
    %81 = arith.addf %79, %80 : vector<1x8x8xf32>
    %cst_38 = arith.constant dense<0xFF800000> : vector<1x8xf32>
    %82 = vector.multi_reduction <maximumf>, %81, %cst_38 [2] : vector<1x8x8xf32> to vector<1x8xf32>
    %83 = vector.shape_cast %82 : vector<1x8xf32> to vector<1x8x1xf32>
    %84 = vector.broadcast %83 : vector<1x8x1xf32> to vector<1x8x8xf32>
    %85 = arith.subf %81, %84 : vector<1x8x8xf32>
    %86 = math.exp %85 : vector<1x8x8xf32>
    %cst_39 = arith.constant dense<0.000000e+00> : vector<1x8xf32>
    %87 = vector.multi_reduction <add>, %86, %cst_39 [2] : vector<1x8x8xf32> to vector<1x8xf32>
    %88 = vector.shape_cast %87 : vector<1x8xf32> to vector<1x8x1xf32>
    %89 = tpu.reciprocal %88 {approx = true} : vector<1x8x1xf32> -> vector<1x8x1xf32>
    %90 = arith.truncf %86 : vector<1x8x8xf32> to vector<1x8x8xbf16>
    "tpu.trace_start"() <{level = 10 : i32, message = "bst,btd->bsd"}> : () -> ()
    %cst_40 = arith.constant dense<0.000000e+00> : vector<1x8x8xf32>
    %91 = tpu.matmul %90, %78, %cst_40 {dimension_numbers = #tpu.dot_dimension_numbers<[2], [1], [1], [2], [0, 0, 0, 1, 1, 2], [0], [0]>} : vector<1x8x8xbf16>, vector<1x8x8xbf16>, vector<1x8x8xf32> -> vector<1x8x8xf32>
    "tpu.trace_stop"() : () -> ()
    %92 = vector.broadcast %89 : vector<1x8x1xf32> to vector<1x8x8xf32>
    %93 = arith.mulf %91, %92 : vector<1x8x8xf32>
    %94 = vector.shape_cast %93 : vector<1x8x8xf32> to vector<8x8xf32>
    %95 = arith.truncf %94 : vector<8x8xf32> to vector<8x8xbf16>
    %96 = vector.extract_strided_slice %27 {offsets = [16, 0], sizes = [8, 32], strides = [1, 1]} : vector<32x32xbf16> to vector<8x32xbf16>
    %cst_41 = arith.constant dense<0.000000e+00> : vector<8x32xf32>
    %97 = tpu.matmul %95, %96, %cst_41 {dimension_numbers = #tpu.dot_dimension_numbers<[1], [0], [0], [1], [0, 0, 1, 1], [], []>} : vector<8x8xbf16>, vector<8x32xbf16>, vector<8x32xf32> -> vector<8x32xf32>
    %98 = arith.addf %75, %97 : vector<8x32xf32>
    %99 = vector.extract_strided_slice %22 {offsets = [0, 0, 24], sizes = [1, 8, 8], strides = [1, 1, 1]} : vector<1x8x32xbf16> to vector<1x8x8xbf16>
    %100 = vector.extract_strided_slice %24 {offsets = [0, 0, 24], sizes = [1, 8, 8], strides = [1, 1, 1]} : vector<1x8x32xbf16> to vector<1x8x8xbf16>
    %101 = vector.extract_strided_slice %26 {offsets = [0, 0, 24], sizes = [1, 8, 8], strides = [1, 1, 1]} : vector<1x8x32xbf16> to vector<1x8x8xbf16>
    "tpu.trace_start"() <{level = 10 : i32, message = "bsd,btd->bst"}> : () -> ()
    %cst_42 = arith.constant dense<0.000000e+00> : vector<1x8x8xf32>
    %102 = tpu.matmul %99, %100, %cst_42 {dimension_numbers = #tpu.dot_dimension_numbers<[2], [2], [1], [1], [0, 0, 0, 1, 1, 1], [0], [0]>} : vector<1x8x8xbf16>, vector<1x8x8xbf16>, vector<1x8x8xf32> -> vector<1x8x8xf32>
    "tpu.trace_stop"() : () -> ()
    %103 = vector.shape_cast %28 : vector<8x8xf32> to vector<1x8x8xf32>
    %104 = arith.addf %102, %103 : vector<1x8x8xf32>
    %cst_43 = arith.constant dense<0xFF800000> : vector<1x8xf32>
    %105 = vector.multi_reduction <maximumf>, %104, %cst_43 [2] : vector<1x8x8xf32> to vector<1x8xf32>
    %106 = vector.shape_cast %105 : vector<1x8xf32> to vector<1x8x1xf32>
    %107 = vector.broadcast %106 : vector<1x8x1xf32> to vector<1x8x8xf32>
    %108 = arith.subf %104, %107 : vector<1x8x8xf32>
    %109 = math.exp %108 : vector<1x8x8xf32>
    %cst_44 = arith.constant dense<0.000000e+00> : vector<1x8xf32>
    %110 = vector.multi_reduction <add>, %109, %cst_44 [2] : vector<1x8x8xf32> to vector<1x8xf32>
    %111 = vector.shape_cast %110 : vector<1x8xf32> to vector<1x8x1xf32>
    %112 = tpu.reciprocal %111 {approx = true} : vector<1x8x1xf32> -> vector<1x8x1xf32>
    %113 = arith.truncf %109 : vector<1x8x8xf32> to vector<1x8x8xbf16>
    "tpu.trace_start"() <{level = 10 : i32, message = "bst,btd->bsd"}> : () -> ()
    %cst_45 = arith.constant dense<0.000000e+00> : vector<1x8x8xf32>
    %114 = tpu.matmul %113, %101, %cst_45 {dimension_numbers = #tpu.dot_dimension_numbers<[2], [1], [1], [2], [0, 0, 0, 1, 1, 2], [0], [0]>} : vector<1x8x8xbf16>, vector<1x8x8xbf16>, vector<1x8x8xf32> -> vector<1x8x8xf32>
    "tpu.trace_stop"() : () -> ()
    %115 = vector.broadcast %112 : vector<1x8x1xf32> to vector<1x8x8xf32>
    %116 = arith.mulf %114, %115 : vector<1x8x8xf32>
    %117 = vector.shape_cast %116 : vector<1x8x8xf32> to vector<8x8xf32>
    %118 = arith.truncf %117 : vector<8x8xf32> to vector<8x8xbf16>
    %119 = vector.extract_strided_slice %27 {offsets = [24, 0], sizes = [8, 32], strides = [1, 1]} : vector<32x32xbf16> to vector<8x32xbf16>
    %cst_46 = arith.constant dense<0.000000e+00> : vector<8x32xf32>
    %120 = tpu.matmul %118, %119, %cst_46 {dimension_numbers = #tpu.dot_dimension_numbers<[1], [0], [0], [1], [0, 0, 1, 1], [], []>} : vector<8x8xbf16>, vector<8x32xbf16>, vector<8x32xf32> -> vector<8x32xf32>
    %121 = arith.addf %98, %120 : vector<8x32xf32>
    %c0_47 = arith.constant 0 : index
    %c0_48 = arith.constant 0 : index
    %122 = vector.load %arg12[%c0_47, %c0_48] : memref<1x32xf32, #tpu.memory_space<vmem>>, vector<1x32xf32>
    %123 = vector.broadcast %122 : vector<1x32xf32> to vector<8x32xf32>
    %124 = arith.addf %121, %123 : vector<8x32xf32>
    %125 = vector.shape_cast %124 : vector<8x32xf32> to vector<1x8x32xf32>
    %c0_49 = arith.constant 0 : index
    %c0_50 = arith.constant 0 : index
    %c0_51 = arith.constant 0 : index
    %126 = vector.load %arg13[%c0_49, %c0_50, %c0_51] : memref<1x8x32xf32, #tpu.memory_space<vmem>>, vector<1x8x32xf32>
    tpu.vector_store %arg13[%c0_49, %c0_50, %c0_51], %125 {strides = array<i32>} : memref<1x8x32xf32, #tpu.memory_space<vmem>>, vector<1x8x32xf32>,
    return
  }
  func.func @transform_0(%arg0: i32) -> (i32, i32, i32) {
    %c0_i32 = arith.constant 0 : i32
    %c0_i32_0 = arith.constant 0 : i32
    %c0_i32_1 = arith.constant 0 : i32
    return %arg0, %c0_i32, %c0_i32_0 : i32, i32, i32
  }
  func.func @transform_1(%arg0: i32) -> (i32, i32, i32) {
    %c0_i32 = arith.constant 0 : i32
    %c0_i32_0 = arith.constant 0 : i32
    %c0_i32_1 = arith.constant 0 : i32
    return %arg0, %c0_i32, %c0_i32_0 : i32, i32, i32
  }
  func.func @transform_2(%arg0: i32) -> (i32, i32, i32) {
    %c0_i32 = arith.constant 0 : i32
    %c0_i32_0 = arith.constant 0 : i32
    %c0_i32_1 = arith.constant 0 : i32
    return %arg0, %c0_i32, %c0_i32_0 : i32, i32, i32
  }
  func.func @transform_3(%arg0: i32) -> (i32, i32) {
    %c0_i32 = arith.constant 0 : i32
    %c0_i32_0 = arith.constant 0 : i32
    %c0_i32_1 = arith.constant 0 : i32
    return %c0_i32, %c0_i32_0 : i32, i32
  }
  func.func @transform_4(%arg0: i32) -> (i32, i32) {
    %c0_i32 = arith.constant 0 : i32
    %c0_i32_0 = arith.constant 0 : i32
    %c0_i32_1 = arith.constant 0 : i32
    return %c0_i32, %c0_i32_0 : i32, i32
  }
  func.func @transform_5(%arg0: i32) -> (i32, i32) {
    %c0_i32 = arith.constant 0 : i32
    %c0_i32_0 = arith.constant 0 : i32
    %c0_i32_1 = arith.constant 0 : i32
    return %c0_i32, %c0_i32_0 : i32, i32
  }
  func.func @transform_6(%arg0: i32) -> (i32, i32) {
    %c0_i32 = arith.constant 0 : i32
    %c0_i32_0 = arith.constant 0 : i32
    %c0_i32_1 = arith.constant 0 : i32
    return %c0_i32, %c0_i32_0 : i32, i32
  }
  func.func @transform_7(%arg0: i32) -> (i32, i32) {
    %c0_i32 = arith.constant 0 : i32
    %c0_i32_0 = arith.constant 0 : i32
    %c0_i32_1 = arith.constant 0 : i32
    return %c0_i32, %c0_i32_0 : i32, i32
  }
  func.func @transform_8(%arg0: i32) -> (i32, i32) {
    %c0_i32 = arith.constant 0 : i32
    %c0_i32_0 = arith.constant 0 : i32
    %c0_i32_1 = arith.constant 0 : i32
    return %c0_i32, %c0_i32_0 : i32, i32
  }
  func.func @transform_9(%arg0: i32) -> (i32, i32) {
    %c0_i32 = arith.constant 0 : i32
    %c0_i32_0 = arith.constant 0 : i32
    %c0_i32_1 = arith.constant 0 : i32
    return %c0_i32, %c0_i32_0 : i32, i32
  }
  func.func @transform_10(%arg0: i32) -> (i32, i32) {
    %c0_i32 = arith.constant 0 : i32
    %c0_i32_0 = arith.constant 0 : i32
    %c0_i32_1 = arith.constant 0 : i32
    return %c0_i32, %c0_i32_0 : i32, i32
  }
  func.func @transform_11(%arg0: i32) -> (i32, i32) {
    %c0_i32 = arith.constant 0 : i32
    %c0_i32_0 = arith.constant 0 : i32
    %c0_i32_1 = arith.constant 0 : i32
    return %c0_i32, %c0_i32_0 : i32, i32
  }
  func.func @transform_12(%arg0: i32) -> (i32, i32, i32) {
    %c0_i32 = arith.constant 0 : i32
    %c0_i32_0 = arith.constant 0 : i32
    %c0_i32_1 = arith.constant 0 : i32
    return %arg0, %c0_i32, %c0_i32_0 : i32, i32, i32
  }
}

</mosaic_0001>

<llo_original>
// kernel: tpu_custom_call.1
$region0: #{tpu_custom_call.1}
  #allocation0 [shape = 'u32[]', space=smem, size = 0x4, offset = 0x4, fixed_abs, tag = 'smem constant byte address 0x4 - core index']
  #allocation1 [shape = 'u32[144,128]{1,0:T(1,128)}', space=vmem, size = 0x12000, scoped, tag = 'internal scratch']
  %s0 = inlined_call_operand.hbm [shape: bf16[2,8,32], index: 0, kind: input, shape index: {}]
  %s1 = inlined_call_operand.hbm [shape: bf16[2,8,32], index: 1, kind: input, shape index: {}]
  %s2 = inlined_call_operand.hbm [shape: bf16[2,8,32], index: 2, kind: input, shape index: {}]
  %s3 = inlined_call_operand.hbm [shape: f32[8,8], index: 3, kind: input, shape index: {}]
  %s4 = inlined_call_operand.hbm [shape: bf16[32,32], index: 4, kind: input, shape index: {}]
  %s5 = inlined_call_operand.vmem [shape: f32[1,32], index: 5, kind: input, shape index: {}]
  %s6 = inlined_call_operand.vmem [shape: bf16[32,32], index: 6, kind: input, shape index: {}]
  %s7 = inlined_call_operand.vmem [shape: f32[1,32], index: 7, kind: input, shape index: {}]
  %s8 = inlined_call_operand.hbm [shape: bf16[32,32], index: 8, kind: input, shape index: {}]
  %s9 = inlined_call_operand.hbm [shape: f32[1,32], index: 9, kind: input, shape index: {}]
  %s10 = inlined_call_operand.vmem [shape: bf16[32,32], index: 10, kind: input, shape index: {}]
  %s11 = inlined_call_operand.vmem [shape: f32[1,32], index: 11, kind: input, shape index: {}]
  %s12 = inlined_call_operand.hbm [shape: f32[2,8,32], index: 12, kind: output, shape index: {}]
  %s13 = sld [smem:[#allocation0]]
  $region109: #{tpu_custom_call.1} parent=0
    _
  %s15 = ssub.s32 1, %s13
  %s16 = scalar_select 0, %s15, %s13
  $region1: #{tpu_custom_call.1} parent=0
    #allocation2 [shape = 'u8[4096]{0}', space=vmem, size = 0x1000, scoped, tag = 'input window, operand 0']
    #allocation3 [shape = 's32[2]{0}', space=sflag, size = 0x8, scoped, tag = 'scoped memory for tpu_custom_call.1']
    #allocation4 [shape = 's32[2]{0}', space=sflag, size = 0x8, scoped, tag = 'scoped memory for tpu_custom_call.1']
    #allocation5 [shape = 'u8[4096]{0}', space=vmem, size = 0x1000, scoped, tag = 'input window, operand 1']
    #allocation6 [shape = 's32[2]{0}', space=sflag, size = 0x8, scoped, tag = 'scoped memory for tpu_custom_call.1']
    #allocation7 [shape = 'u8[4096]{0}', space=vmem, size = 0x1000, scoped, tag = 'input window, operand 2']
    #allocation8 [shape = 'u8[4096]{0}', space=vmem, size = 0x1000, scoped, tag = 'input window, operand 3, single buffered']
    #allocation9 [shape = 's32[1]{0}', space=sflag, size = 0x4, scoped, tag = 'scoped memory for tpu_custom_call.1']
    #allocation10 [shape = 'u8[8192]{0}', space=vmem, size = 0x2000, scoped, tag = 'input window, operand 4, single buffered']
    #allocation11 [shape = 'u8[8192]{0}', space=vmem, size = 0x2000, scoped, tag = 'input window, operand 8, single buffered']
    #allocation12 [shape = 's32[1]{0}', space=sflag, size = 0x4, scoped, tag = 'scoped memory for tpu_custom_call.1']
    #allocation13 [shape = 'u8[512]{0}', space=vmem, size = 0x400, scoped, tag = 'input window, operand 9, single buffered']
    #allocation14 [shape = 'u8[8192]{0}', space=vmem, size = 0x2000, scoped, tag = 'output window, operand 0']
    %17 = vsyncpa [#allocation3], 0
    %s18 = scalar_lea.sflag [#allocation3], 1
    %19 = vsyncpa %s18, 0
    %20 = vsyncpa [#allocation6], 0
    %s21 = scalar_lea.sflag [#allocation6], 1
    %22 = vsyncpa %s21, 0
    %23 = vsyncpa [#allocation9], 0
    %24 = vsyncpa [#allocation12], 0
    %25 = vsyncpa [#allocation4], 0
    %s26 = scalar_lea.sflag [#allocation4], 1
    %27 = vsyncpa %s26, 0
    loop: start=0, step=1, limit=4
    $region2: #{tpu_custom_call.1} parent=1 // loop_pre_header
      _
    $region3: #{tpu_custom_call.1} parent=1 // loop_header
      %s29 = sphi 0, %s33
      %p30 = scmp.ge.s32.totalorder %s29, 4
      %s39 = sphi 0, %s41
      %s42 = sphi 0, %s39
      %s43 = sphi 0, %s42
      %s59 = sphi 0, %s43
      %s65 = sphi 0, %s67
      %s68 = sphi 0, %s65
      %s69 = sphi 0, %s68
      %s85 = sphi 0, %s69
      %s91 = sphi 0, %s93
      %s94 = sphi 0, %s91
      %s95 = sphi 0, %s94
      %s111 = sphi 0, %s95
      %s115 = sphi 0, %s115
      %s117 = sphi 0, %s115
      %s118 = sphi 0, %s117
      %s132 = sphi 0, %s118
      %s136 = sphi 0, %s136
      %s138 = sphi 0, %s136
      %s139 = sphi 0, %s138
      %s153 = sphi 0, %s139
      %s157 = sphi 0, %s157
      %s159 = sphi 0, %s157
      %s160 = sphi 0, %s159
      %s174 = sphi 0, %s160
      %s178 = sphi 0, %s178
      %s180 = sphi 0, %s178
      %s181 = sphi 0, %s180
      %s195 = sphi 0, %s181
      %s199 = sphi 0, %s199
      %s201 = sphi 0, %s199
      %s202 = sphi 0, %s201
      %s216 = sphi 0, %s202
      %s220 = sphi 0, %s220
      %s222 = sphi 0, %s220
      %s223 = sphi 0, %s222
      %s237 = sphi 0, %s223
      %s241 = sphi 0, %s241
      %s243 = sphi 0, %s241
      %s244 = sphi 0, %s243
      %s258 = sphi 0, %s244
      %s262 = sphi 0, %s262
      %s264 = sphi 0, %s262
      %s265 = sphi 0, %s264
      %s279 = sphi 0, %s265
      %s283 = sphi 0, %s283
      %s285 = sphi 0, %s283
      %s286 = sphi 0, %s285
      %s300 = sphi 0, %s286
      %s306 = sphi 0, %s308
      %s309 = sphi 0, %s306
      %s310 = sphi 0, %s309
      %s326 = sphi 0, %s310
    $region4: #{tpu_custom_call.1} parent=1 // loop_header_branch
      %32 = sbr.rel (%p30) target = $region8
    $region5: #{tpu_custom_call.1} parent=1 // loop_body
      %s34 = ssub.s32 %s29, 1
      %s35 = ssub.s32 %s29, 2
      %s36 = sadd.s32 %s29, 1
      %s37 = ssub.s32 %s29, %s36
      %p38 = scmp.eq.s32.totalorder %s37, 0
      %s40 = sadd.s32 %s39, 1
      %s41 = scalar_select %p38, %s39, %s40
      %p44 = pneg %p38
      %p45 = scmp.eq.s32.totalorder %s29, 1
      %p46 = por %p44, %p45
      %p47 = scmp.ne.s32.totalorder %s39, %s42
      %p48 = scmp.eq.s32.totalorder %s29, 0
      %p49 = por %p47, %p48
      %p50 = scmp.ne.s32.totalorder %s39, %s42
      %p51 = scmp.eq.s32.totalorder %s34, 1
      %p52 = por %p50, %p51
      %p53 = scmp.ne.s32.totalorder %s42, %s43
      %p54 = scmp.eq.s32.totalorder %s34, 0
      %p55 = por %p53, %p54
      %p56 = scmp.ne.s32.totalorder %s42, %s43
      %p57 = scmp.eq.s32.totalorder %s35, 1
      %p58 = por %p56, %p57
      %p60 = scmp.ne.s32.totalorder %s43, %s59
      %p61 = scmp.eq.s32.totalorder %s35, 0
      %p62 = por %p60, %p61
      %s63 = ssub.s32 %s29, %s36
      %p64 = scmp.eq.s32.totalorder %s63, 0
      %s66 = sadd.s32 %s65, 1
      %s67 = scalar_select %p64, %s65, %s66
      %p70 = pneg %p64
      %p71 = scmp.eq.s32.totalorder %s29, 1
      %p72 = por %p70, %p71
      %p73 = scmp.ne.s32.totalorder %s65, %s68
      %p74 = scmp.eq.s32.totalorder %s29, 0
      %p75 = por %p73, %p74
      %p76 = scmp.ne.s32.totalorder %s65, %s68
      %p77 = scmp.eq.s32.totalorder %s34, 1
      %p78 = por %p76, %p77
      %p79 = scmp.ne.s32.totalorder %s68, %s69
      %p80 = scmp.eq.s32.totalorder %s34, 0
      %p81 = por %p79, %p80
      %p82 = scmp.ne.s32.totalorder %s68, %s69
      %p83 = scmp.eq.s32.totalorder %s35, 1
      %p84 = por %p82, %p83
      %p86 = scmp.ne.s32.totalorder %s69, %s85
      %p87 = scmp.eq.s32.totalorder %s35, 0
      %p88 = por %p86, %p87
      %s89 = ssub.s32 %s29, %s36
      %p90 = scmp.eq.s32.totalorder %s89, 0
      %s92 = sadd.s32 %s91, 1
      %s93 = scalar_select %p90, %s91, %s92
      %p96 = pneg %p90
      %p97 = scmp.eq.s32.totalorder %s29, 1
      %p98 = por %p96, %p97
      %p99 = scmp.ne.s32.totalorder %s91, %s94
      %p100 = scmp.eq.s32.totalorder %s29, 0
      %p101 = por %p99, %p100
      %p102 = scmp.ne.s32.totalorder %s91, %s94
      %p103 = scmp.eq.s32.totalorder %s34, 1
      %p104 = por %p102, %p103
      %p105 = scmp.ne.s32.totalorder %s94, %s95
      %p106 = scmp.eq.s32.totalorder %s34, 0
      %p107 = por %p105, %p106
      %p108 = scmp.ne.s32.totalorder %s94, %s95
      %p109 = scmp.eq.s32.totalorder %s35, 1
      %p110 = por %p108, %p109
      %p112 = scmp.ne.s32.totalorder %s95, %s111
      %p113 = scmp.eq.s32.totalorder %s35, 0
      %p114 = por %p112, %p113
      %s116 = sadd.s32 %s115, 1
      %p119 = scmp.eq.s32.totalorder %s29, 1
      %p120 = scmp.ne.s32.totalorder %s115, %s117
      %p121 = scmp.eq.s32.totalorder %s29, 0
      %p122 = por %p120, %p121
      %p123 = scmp.ne.s32.totalorder %s115, %s117
      %p124 = scmp.eq.s32.totalorder %s34, 1
      %p125 = por %p123, %p124
      %p126 = scmp.ne.s32.totalorder %s117, %s118
      %p127 = scmp.eq.s32.totalorder %s34, 0
      %p128 = por %p126, %p127
      %p129 = scmp.ne.s32.totalorder %s117, %s118
      %p130 = scmp.eq.s32.totalorder %s35, 1
      %p131 = por %p129, %p130
      %p133 = scmp.ne.s32.totalorder %s118, %s132
      %p134 = scmp.eq.s32.totalorder %s35, 0
      %p135 = por %p133, %p134
      %s137 = sadd.s32 %s136, 1
      %p140 = scmp.eq.s32.totalorder %s29, 1
      %p141 = scmp.ne.s32.totalorder %s136, %s138
      %p142 = scmp.eq.s32.totalorder %s29, 0
      %p143 = por %p141, %p142
      %p144 = scmp.ne.s32.totalorder %s136, %s138
      %p145 = scmp.eq.s32.totalorder %s34, 1
      %p146 = por %p144, %p145
      %p147 = scmp.ne.s32.totalorder %s138, %s139
      %p148 = scmp.eq.s32.totalorder %s34, 0
      %p149 = por %p147, %p148
      %p150 = scmp.ne.s32.totalorder %s138, %s139
      %p151 = scmp.eq.s32.totalorder %s35, 1
      %p152 = por %p150, %p151
      %p154 = scmp.ne.s32.totalorder %s139, %s153
      %p155 = scmp.eq.s32.totalorder %s35, 0
      %p156 = por %p154, %p155
      %s158 = sadd.s32 %s157, 1
      %p161 = scmp.eq.s32.totalorder %s29, 1
      %p162 = scmp.ne.s32.totalorder %s157, %s159
      %p163 = scmp.eq.s32.totalorder %s29, 0
      %p164 = por %p162, %p163
      %p165 = scmp.ne.s32.totalorder %s157, %s159
      %p166 = scmp.eq.s32.totalorder %s34, 1
      %p167 = por %p165, %p166
      %p168 = scmp.ne.s32.totalorder %s159, %s160
      %p169 = scmp.eq.s32.totalorder %s34, 0
      %p170 = por %p168, %p169
      %p171 = scmp.ne.s32.totalorder %s159, %s160
      %p172 = scmp.eq.s32.totalorder %s35, 1
      %p173 = por %p171, %p172
      %p175 = scmp.ne.s32.totalorder %s160, %s174
      %p176 = scmp.eq.s32.totalorder %s35, 0
      %p177 = por %p175, %p176
      %s179 = sadd.s32 %s178, 1
      %p182 = scmp.eq.s32.totalorder %s29, 1
      %p183 = scmp.ne.s32.totalorder %s178, %s180
      %p184 = scmp.eq.s32.totalorder %s29, 0
      %p185 = por %p183, %p184
      %p186 = scmp.ne.s32.totalorder %s178, %s180
      %p187 = scmp.eq.s32.totalorder %s34, 1
      %p188 = por %p186, %p187
      %p189 = scmp.ne.s32.totalorder %s180, %s181
      %p190 = scmp.eq.s32.totalorder %s34, 0
      %p191 = por %p189, %p190
      %p192 = scmp.ne.s32.totalorder %s180, %s181
      %p193 = scmp.eq.s32.totalorder %s35, 1
      %p194 = por %p192, %p193
      %p196 = scmp.ne.s32.totalorder %s181, %s195
      %p197 = scmp.eq.s32.totalorder %s35, 0
      %p198 = por %p196, %p197
      %s200 = sadd.s32 %s199, 1
      %p203 = scmp.eq.s32.totalorder %s29, 1
      %p204 = scmp.ne.s32.totalorder %s199, %s201
      %p205 = scmp.eq.s32.totalorder %s29, 0
      %p206 = por %p204, %p205
      %p207 = scmp.ne.s32.totalorder %s199, %s201
      %p208 = scmp.eq.s32.totalorder %s34, 1
      %p209 = por %p207, %p208
      %p210 = scmp.ne.s32.totalorder %s201, %s202
      %p211 = scmp.eq.s32.totalorder %s34, 0
      %p212 = por %p210, %p211
      %p213 = scmp.ne.s32.totalorder %s201, %s202
      %p214 = scmp.eq.s32.totalorder %s35, 1
      %p215 = por %p213, %p214
      %p217 = scmp.ne.s32.totalorder %s202, %s216
      %p218 = scmp.eq.s32.totalorder %s35, 0
      %p219 = por %p217, %p218
      %s221 = sadd.s32 %s220, 1
      %p224 = scmp.eq.s32.totalorder %s29, 1
      %p225 = scmp.ne.s32.totalorder %s220, %s222
      %p226 = scmp.eq.s32.totalorder %s29, 0
      %p227 = por %p225, %p226
      %p228 = scmp.ne.s32.totalorder %s220, %s222
      %p229 = scmp.eq.s32.totalorder %s34, 1
      %p230 = por %p228, %p229
      %p231 = scmp.ne.s32.totalorder %s222, %s223
      %p232 = scmp.eq.s32.totalorder %s34, 0
      %p233 = por %p231, %p232
      %p234 = scmp.ne.s32.totalorder %s222, %s223
      %p235 = scmp.eq.s32.totalorder %s35, 1
      %p236 = por %p234, %p235
      %p238 = scmp.ne.s32.totalorder %s223, %s237
      %p239 = scmp.eq.s32.totalorder %s35, 0
      %p240 = por %p238, %p239
      %s242 = sadd.s32 %s241, 1
      %p245 = scmp.eq.s32.totalorder %s29, 1
      %p246 = scmp.ne.s32.totalorder %s241, %s243
      %p247 = scmp.eq.s32.totalorder %s29, 0
      %p248 = por %p246, %p247
      %p249 = scmp.ne.s32.totalorder %s241, %s243
      %p250 = scmp.eq.s32.totalorder %s34, 1
      %p251 = por %p249, %p250
      %p252 = scmp.ne.s32.totalorder %s243, %s244
      %p253 = scmp.eq.s32.totalorder %s34, 0
      %p254 = por %p252, %p253
      %p255 = scmp.ne.s32.totalorder %s243, %s244
      %p256 = scmp.eq.s32.totalorder %s35, 1
      %p257 = por %p255, %p256
      %p259 = scmp.ne.s32.totalorder %s244, %s258
      %p260 = scmp.eq.s32.totalorder %s35, 0
      %p261 = por %p259, %p260
      %s263 = sadd.s32 %s262, 1
      %p266 = scmp.eq.s32.totalorder %s29, 1
      %p267 = scmp.ne.s32.totalorder %s262, %s264
      %p268 = scmp.eq.s32.totalorder %s29, 0
      %p269 = por %p267, %p268
      %p270 = scmp.ne.s32.totalorder %s262, %s264
      %p271 = scmp.eq.s32.totalorder %s34, 1
      %p272 = por %p270, %p271
      %p273 = scmp.ne.s32.totalorder %s264, %s265
      %p274 = scmp.eq.s32.totalorder %s34, 0
      %p275 = por %p273, %p274
      %p276 = scmp.ne.s32.totalorder %s264, %s265
      %p277 = scmp.eq.s32.totalorder %s35, 1
      %p278 = por %p276, %p277
      %p280 = scmp.ne.s32.totalorder %s265, %s279
      %p281 = scmp.eq.s32.totalorder %s35, 0
      %p282 = por %p280, %p281
      %s284 = sadd.s32 %s283, 1
      %p287 = scmp.eq.s32.totalorder %s29, 1
      %p288 = scmp.ne.s32.totalorder %s283, %s285
      %p289 = scmp.eq.s32.totalorder %s29, 0
      %p290 = por %p288, %p289
      %p291 = scmp.ne.s32.totalorder %s283, %s285
      %p292 = scmp.eq.s32.totalorder %s34, 1
      %p293 = por %p291, %p292
      %p294 = scmp.ne.s32.totalorder %s285, %s286
      %p295 = scmp.eq.s32.totalorder %s34, 0
      %p296 = por %p294, %p295
      %p297 = scmp.ne.s32.totalorder %s285, %s286
      %p298 = scmp.eq.s32.totalorder %s35, 1
      %p299 = por %p297, %p298
      %p301 = scmp.ne.s32.totalorder %s286, %s300
      %p302 = scmp.eq.s32.totalorder %s35, 0
      %p303 = por %p301, %p302
      %s304 = ssub.s32 %s29, %s36
      %p305 = scmp.eq.s32.totalorder %s304, 0
      %s307 = sadd.s32 %s306, 1
      %s308 = scalar_select %p305, %s306, %s307
      %p311 = pneg %p305
      %p312 = scmp.eq.s32.totalorder %s29, 1
      %p313 = por %p311, %p312
      %p314 = scmp.ne.s32.totalorder %s306, %s309
      %p315 = scmp.eq.s32.totalorder %s29, 0
      %p316 = por %p314, %p315
      %p317 = scmp.ne.s32.totalorder %s306, %s309
      %p318 = scmp.eq.s32.totalorder %s34, 1
      %p319 = por %p317, %p318
      %p320 = scmp.ne.s32.totalorder %s309, %s310
      %p321 = scmp.eq.s32.totalorder %s34, 0
      %p322 = por %p320, %p321
      %p323 = scmp.ne.s32.totalorder %s309, %s310
      %p324 = scmp.eq.s32.totalorder %s35, 1
      %p325 = por %p323, %p324
      %p327 = scmp.ne.s32.totalorder %s310, %s326
      %p328 = scmp.eq.s32.totalorder %s35, 0
      %p329 = por %p327, %p328
      %p330 = scmp.le.s32.totalorder 1, %s29
      %p331 = scmp.lt.s32.totalorder %s29, 3
      %p332 = pnand %p330, %p331
      %p333 = pneg %p332
      // Predicated region
      $region9: #{tpu_custom_call.1} parent=5 // pred_check
        _
      $region10: #{tpu_custom_call.1} parent=5 // pred_check_branch
        %335 = sbr.rel (%p332) target = $region12
      $region11: #{tpu_custom_call.1} parent=5 // pred_region
        %s336 = ssub.s32 %s29, 1
        // Predicated region
        $region13: #{tpu_custom_call.1} parent=11 // pred_check
          %p337 = pneg %p128
        $region14: #{tpu_custom_call.1} parent=11 // pred_check_branch
          %339 = sbr.rel (%p337) target = $region16
        $region15: #{tpu_custom_call.1} parent=11 // pred_region
          %s341 = ssub.s32 128, 128
          %342 = vsyncadd [#allocation9], %s341
          %s344 = sshll.u32 [#allocation8], 4
          %s345 = int_to_ptr.vmem [resolvable:$true] %s344
          %347 = dma.hbm_to_vmem [thread:$0]  %s3, 128, %s345, [#allocation9]
        $region16: #{tpu_custom_call.1} parent=11 // pred_fallthru
          _
        // Predicated region
        $region17: #{tpu_custom_call.1} parent=11 // pred_check
          %p348 = pneg %p149
        $region18: #{tpu_custom_call.1} parent=11 // pred_check_branch
          %350 = sbr.rel (%p348) target = $region20
        $region19: #{tpu_custom_call.1} parent=11 // pred_region
          %s352 = ssub.s32 256, 256
          %353 = vsyncadd [#allocation9], %s352
          %s354 = sshll.u32 [#allocation10], 4
          %s355 = int_to_ptr.vmem [resolvable:$true] %s354
          %360 = dma.hbm_to_vmem [thread:$0]  %s4, 256, %s355, [#allocation9], 64, 64, 4
        $region20: #{tpu_custom_call.1} parent=11 // pred_fallthru
          _
        // Predicated region
        $region21: #{tpu_custom_call.1} parent=11 // pred_check
          %p361 = pneg %p170
        $region22: #{tpu_custom_call.1} parent=11 // pred_check_branch
          %363 = sbr.rel (%p361) target = $region24
        $region23: #{tpu_custom_call.1} parent=11 // pred_region
          _
        $region24: #{tpu_custom_call.1} parent=11 // pred_fallthru
          _
        // Predicated region
        $region25: #{tpu_custom_call.1} parent=11 // pred_check
          %p364 = pneg %p191
        $region26: #{tpu_custom_call.1} parent=11 // pred_check_branch
          %366 = sbr.rel (%p364) target = $region28
        $region27: #{tpu_custom_call.1} parent=11 // pred_region
          _
        $region28: #{tpu_custom_call.1} parent=11 // pred_fallthru
          _
        // Predicated region
        $region29: #{tpu_custom_call.1} parent=11 // pred_check
          %p367 = pneg %p212
        $region30: #{tpu_custom_call.1} parent=11 // pred_check_branch
          %369 = sbr.rel (%p367) target = $region32
        $region31: #{tpu_custom_call.1} parent=11 // pred_region
          _
        $region32: #{tpu_custom_call.1} parent=11 // pred_fallthru
          _
        // Predicated region
        $region33: #{tpu_custom_call.1} parent=11 // pred_check
          %p370 = pneg %p233
        $region34: #{tpu_custom_call.1} parent=11 // pred_check_branch
          %372 = sbr.rel (%p370) target = $region36
        $region35: #{tpu_custom_call.1} parent=11 // pred_region
          %s374 = ssub.s32 256, 256
          %375 = vsyncadd [#allocation12], %s374
          %s376 = sshll.u32 [#allocation11], 4
          %s377 = int_to_ptr.vmem [resolvable:$true] %s376
          %382 = dma.hbm_to_vmem [thread:$0]  %s8, 256, %s377, [#allocation12], 64, 64, 4
        $region36: #{tpu_custom_call.1} parent=11 // pred_fallthru
          _
        // Predicated region
        $region37: #{tpu_custom_call.1} parent=11 // pred_check
          %p383 = pneg %p254
        $region38: #{tpu_custom_call.1} parent=11 // pred_check_branch
          %385 = sbr.rel (%p383) target = $region40
        $region39: #{tpu_custom_call.1} parent=11 // pred_region
          %s387 = ssub.s32 16, 16
          %388 = vsyncadd [#allocation12], %s387
          %s390 = sshll.u32 [#allocation13], 4
          %s391 = int_to_ptr.vmem [resolvable:$true] %s390
          %393 = dma.hbm_to_vmem [thread:$0]  %s9, 16, %s391, [#allocation12]
        $region40: #{tpu_custom_call.1} parent=11 // pred_fallthru
          _
        // Predicated region
        $region41: #{tpu_custom_call.1} parent=11 // pred_check
          %p394 = pneg %p275
        $region42: #{tpu_custom_call.1} parent=11 // pred_check_branch
          %396 = sbr.rel (%p394) target = $region44
        $region43: #{tpu_custom_call.1} parent=11 // pred_region
          _
        $region44: #{tpu_custom_call.1} parent=11 // pred_fallthru
          _
        // Predicated region
        $region45: #{tpu_custom_call.1} parent=11 // pred_check
          %p397 = pneg %p296
        $region46: #{tpu_custom_call.1} parent=11 // pred_check_branch
          %399 = sbr.rel (%p397) target = $region48
        $region47: #{tpu_custom_call.1} parent=11 // pred_region
          _
        $region48: #{tpu_custom_call.1} parent=11 // pred_fallthru
          _
      $region12: #{tpu_custom_call.1} parent=5 // pred_fallthru
        _
      %p400 = scmp.lt.s32.totalorder %s29, 2
      // Predicated region
      $region49: #{tpu_custom_call.1} parent=5 // pred_check
        %p401 = pneg %p400
      $region50: #{tpu_custom_call.1} parent=5 // pred_check_branch
        %403 = sbr.rel (%p401) target = $region52
      $region51: #{tpu_custom_call.1} parent=5 // pred_region
        // Predicated region
        $region53: #{tpu_custom_call.1} parent=51 // pred_check
          %p404 = pneg %p49
        $region54: #{tpu_custom_call.1} parent=51 // pred_check_branch
          %406 = sbr.rel (%p404) target = $region56
        $region55: #{tpu_custom_call.1} parent=51 // pred_region
          %s407 = sand.u32 %s39, 1
          %s408 = scalar_lea.sflag [#allocation3], %s407
          %s409 = sand.u32 %s39, 1
          %s410 = smul.addr %s409, 4
          %s411 = scalar_lea.vmem [#allocation2], %s410
          %s413 = ssub.s32 64, 64
          %414 = vsyncadd %s408, %s413
          %s415 = smul.addr %s29, 64
          %s416 = scalar_lea.hbm %s0, %s415
          %s418 = sshll.u32 %s411, 4
          %s419 = int_to_ptr.vmem [resolvable:$true] %s418
          %421 = dma.hbm_to_vmem [thread:$0]  %s416, 64, %s419, %s408
        $region56: #{tpu_custom_call.1} parent=51 // pred_fallthru
          _
        // Predicated region
        $region57: #{tpu_custom_call.1} parent=51 // pred_check
          %p422 = pneg %p75
        $region58: #{tpu_custom_call.1} parent=51 // pred_check_branch
          %424 = sbr.rel (%p422) target = $region60
        $region59: #{tpu_custom_call.1} parent=51 // pred_region
          %s425 = sand.u32 %s29, 1
          %s426 = scalar_lea.sflag [#allocation6], %s425
          %s427 = sand.u32 %s65, 1
          %s428 = smul.addr %s427, 4
          %s429 = scalar_lea.vmem [#allocation5], %s428
          %s431 = ssub.s32 64, 64
          %432 = vsyncadd %s426, %s431
          %s433 = smul.addr %s29, 64
          %s434 = scalar_lea.hbm %s1, %s433
          %s436 = sshll.u32 %s429, 4
          %s437 = int_to_ptr.vmem [resolvable:$true] %s436
          %439 = dma.hbm_to_vmem [thread:$0]  %s434, 64, %s437, %s426
        $region60: #{tpu_custom_call.1} parent=51 // pred_fallthru
          _
        // Predicated region
        $region61: #{tpu_custom_call.1} parent=51 // pred_check
          %p440 = pneg %p101
        $region62: #{tpu_custom_call.1} parent=51 // pred_check_branch
          %442 = sbr.rel (%p440) target = $region64
        $region63: #{tpu_custom_call.1} parent=51 // pred_region
          %s443 = sand.u32 %s29, 1
          %s444 = scalar_lea.sflag [#allocation6], %s443
          %s445 = sand.u32 %s91, 1
          %s446 = smul.addr %s445, 4
          %s447 = scalar_lea.vmem [#allocation7], %s446
          %s449 = ssub.s32 64, 64
          %450 = vsyncadd %s444, %s449
          %s451 = smul.addr %s29, 64
          %s452 = scalar_lea.hbm %s2, %s451
          %s454 = sshll.u32 %s447, 4
          %s455 = int_to_ptr.vmem [resolvable:$true] %s454
          %457 = dma.hbm_to_vmem [thread:$0]  %s452, 64, %s455, %s444
        $region64: #{tpu_custom_call.1} parent=51 // pred_fallthru
          _
      $region52: #{tpu_custom_call.1} parent=5 // pred_fallthru
        _
      %p458 = scmp.le.s32.totalorder 1, %s29
      %p459 = scmp.lt.s32.totalorder %s29, 3
      %p460 = pnand %p458, %p459
      %p461 = pneg %p460
      // Predicated region
      $region65: #{tpu_custom_call.1} parent=5 // pred_check
        _
      $region66: #{tpu_custom_call.1} parent=5 // pred_check_branch
        %463 = sbr.rel (%p460) target = $region68
      $region67: #{tpu_custom_call.1} parent=5 // pred_region
        %s464 = ssub.s32 %s29, 1
        %s465 = sand.u32 %s42, 1
        %s466 = scalar_lea.sflag [#allocation3], %s465
        %s467 = sand.u32 %s42, 1
        %s468 = smul.addr %s467, 4
        %s469 = scalar_lea.vmem [#allocation2], %s468
        // Predicated region
        $region69: #{tpu_custom_call.1} parent=67 // pred_check
          %p470 = pneg %p55
        $region70: #{tpu_custom_call.1} parent=67 // pred_check_branch
          %472 = sbr.rel (%p470) target = $region72
        $region71: #{tpu_custom_call.1} parent=67 // pred_region
          %473 = dma.done %s466, 64
        $region72: #{tpu_custom_call.1} parent=67 // pred_fallthru
          _
        %s474 = sand.u32 %s34, 1
        %s475 = scalar_lea.sflag [#allocation6], %s474
        %s476 = sand.u32 %s68, 1
        %s477 = smul.addr %s476, 4
        %s478 = scalar_lea.vmem [#allocation5], %s477
        // Predicated region
        $region73: #{tpu_custom_call.1} parent=67 // pred_check
          %p479 = pneg %p81
        $region74: #{tpu_custom_call.1} parent=67 // pred_check_branch
          %481 = sbr.rel (%p479) target = $region76
        $region75: #{tpu_custom_call.1} parent=67 // pred_region
          %482 = dma.done %s475, 64
        $region76: #{tpu_custom_call.1} parent=67 // pred_fallthru
          _
        %s483 = sand.u32 %s34, 1
        %s484 = scalar_lea.sflag [#allocation6], %s483
        %s485 = sand.u32 %s94, 1
        %s486 = smul.addr %s485, 4
        %s487 = scalar_lea.vmem [#allocation7], %s486
        // Predicated region
        $region77: #{tpu_custom_call.1} parent=67 // pred_check
          %p488 = pneg %p107
        $region78: #{tpu_custom_call.1} parent=67 // pred_check_branch
          %490 = sbr.rel (%p488) target = $region80
        $region79: #{tpu_custom_call.1} parent=67 // pred_region
          %491 = dma.done %s484, 64
        $region80: #{tpu_custom_call.1} parent=67 // pred_fallthru
          _
        // Predicated region
        $region81: #{tpu_custom_call.1} parent=67 // pred_check
          %p492 = pneg %p128
        $region82: #{tpu_custom_call.1} parent=67 // pred_check_branch
          %494 = sbr.rel (%p492) target = $region84
        $region83: #{tpu_custom_call.1} parent=67 // pred_region
          %495 = dma.done [#allocation9], 128
        $region84: #{tpu_custom_call.1} parent=67 // pred_fallthru
          _
        // Predicated region
        $region85: #{tpu_custom_call.1} parent=67 // pred_check
          %p496 = pneg %p149
        $region86: #{tpu_custom_call.1} parent=67 // pred_check_branch
          %498 = sbr.rel (%p496) target = $region88
        $region87: #{tpu_custom_call.1} parent=67 // pred_region
          %499 = dma.done [#allocation9], 256
        $region88: #{tpu_custom_call.1} parent=67 // pred_fallthru
          _
        // Predicated region
        $region89: #{tpu_custom_call.1} parent=67 // pred_check
          %p500 = pneg %p233
        $region90: #{tpu_custom_call.1} parent=67 // pred_check_branch
          %502 = sbr.rel (%p500) target = $region92
        $region91: #{tpu_custom_call.1} parent=67 // pred_region
          %503 = dma.done [#allocation12], 256
        $region92: #{tpu_custom_call.1} parent=67 // pred_fallthru
          _
        // Predicated region
        $region93: #{tpu_custom_call.1} parent=67 // pred_check
          %p504 = pneg %p254
        $region94: #{tpu_custom_call.1} parent=67 // pred_check_branch
          %506 = sbr.rel (%p504) target = $region96
        $region95: #{tpu_custom_call.1} parent=67 // pred_region
          %507 = dma.done [#allocation12], 16
        $region96: #{tpu_custom_call.1} parent=67 // pred_fallthru
          _
        %s508 = sand.u32 %s42, 1
        %s509 = scalar_lea.sflag [#allocation3], %s508
        %s510 = sand.u32 %s42, 1
        %s511 = smul.addr %s510, 4
        %s512 = scalar_lea.vmem [#allocation2], %s511
        %p513 = pneg %p55
        %p514 = pneg %p52
        %s515 = sand.u32 %s34, 1
        %s516 = scalar_lea.sflag [#allocation6], %s515
        %s517 = sand.u32 %s68, 1
        %s518 = smul.addr %s517, 4
        %s519 = scalar_lea.vmem [#allocation5], %s518
        %p520 = pneg %p81
        %p521 = pneg %p78
        %s522 = sand.u32 %s34, 1
        %s523 = scalar_lea.sflag [#allocation6], %s522
        %s524 = sand.u32 %s94, 1
        %s525 = smul.addr %s524, 4
        %s526 = scalar_lea.vmem [#allocation7], %s525
        %p527 = pneg %p107
        %p528 = pneg %p104
        %p529 = pneg %p128
        %p530 = pneg %p125
        %p531 = pneg %p149
        %p532 = pneg %p146
        %p533 = pneg %p170
        %p534 = pneg %p167
        %p535 = pneg %p191
        %p536 = pneg %p188
        %p537 = pneg %p212
        %p538 = pneg %p209
        %p539 = pneg %p233
        %p540 = pneg %p230
        %p541 = pneg %p254
        %p542 = pneg %p251
        %p543 = pneg %p275
        %p544 = pneg %p272
        %p545 = pneg %p296
        %p546 = pneg %p293
        %p547 = pneg %p322
        %p548 = pneg %p319
        %s549 = sand.u32 %s309, 1
        %s550 = scalar_lea.sflag [#allocation4], %s549
        %s551 = sand.u32 %s309, 1
        %s552 = smul.addr %s551, 8
        %s553 = scalar_lea.vmem [#allocation14], %s552
        %v555 = vld [vmem:[%s469] sm:$0xf]
        %v556 = vld [vmem:[%s478] sm:$0xf]
        %v557 = vld [vmem:[%s487] sm:$0xf]
        %v558 = vld [vmem:[#allocation10] sm:$0xf]
        %v559 = vld [vmem:[#allocation10 + $0x4] sm:$0xf]
        %v560 = vld [vmem:[#allocation10 + $0x8] sm:$0xf]
        %v561 = vld [vmem:[#allocation10 + $0xc] sm:$0xf]
        %v562 = vld [vmem:[%s5] sm:$0x1]
        %v564 = vlaneseq
        %v565 = vshrl.u32 %v564, 7
        %v566 = vsub.s32 0, %v565
        %v567 = vrot.slane %v562, %v566
        %v573 = vunpack.c.l.b16 %v558
        %v574 = vunpack.c.l.b16 %v559
        %v575 = vunpack.c.l.b16 %v560
        %v576 = vunpack.c.l.b16 %v561
        %v577 = vpack.c.b16 %v574, %v573
        %v578 = vpack.c.b16 %v576, %v575
        %vm581 = vcmask 261120
        %v583 = vsel %vm581, %v555, 0
        %585 = vmatprep.subr.bf16.mxu0 0
        %586 = vmatpush1.bf16.msra.mxu0 %v577
        %587 = vmatprep.subr.bf16.mxu0 0
        %588 = vmatpush1.bf16.msra.mxu0 %v578
        %589 = vmatprep.subr.bf16.mxu0 0
        %590 = vmatpush1.bf16.msra.mxu0 0
        %591 = vmatprep.subr.bf16.mxu0 0
        %592 = vmatpush1.bf16.msra.mxu0 0
        %593 = vmatprep.subr.bf16.mxu0 0
        %594 = vmatpush1.bf16.msra.mxu0 0
        %595 = vmatprep.subr.bf16.mxu0 0
        %596 = vmatpush1.bf16.msra.mxu0 0
        %597 = vmatprep.subr.bf16.mxu0 0
        %598 = vmatpush1.bf16.msra.mxu0 0
        %599 = vmatprep.subr.bf16.mxu0 0
        %600 = vmatpush1.bf16.msra.mxu0 0
        %601 = vmatprep.subr.bf16.mxu0 0
        %602 = vmatpush1.bf16.msra.mxu0 0
        %603 = vmatprep.subr.bf16.mxu0 0
        %604 = vmatpush1.bf16.msra.mxu0 0
        %605 = vmatprep.subr.bf16.mxu0 0
        %606 = vmatpush1.bf16.msra.mxu0 0
        %607 = vmatprep.subr.bf16.mxu0 0
        %608 = vmatpush1.bf16.msra.mxu0 0
        %609 = vmatprep.subr.bf16.mxu0 0
        %610 = vmatpush1.bf16.msra.mxu0 0
        %611 = vmatprep.subr.bf16.mxu0 0
        %612 = vmatpush1.bf16.msra.mxu0 0
        %613 = vmatprep.subr.bf16.mxu0 0
        %614 = vmatpush1.bf16.msra.mxu0 0
        %615 = vmatprep.subr.bf16.mxu0 0
        %616 = vmatpush1.bf16.msra.mxu0 0
        %617 = vmatprep.mubr.bf16.mxu0 0
        %618 = vmatmul.mubr.bf16.gmra.mrb[0].mxu0 %v583
        %v619 = vpop.f32.mrb[0].mxu0
        %v620 = vadd.f32 %v567, %v619
        %v621 = vpop.f32.mrb[0].mxu0
        %v622 = vpop.f32.mrb[0].mxu0
        %v623 = vpop.f32.mrb[0].mxu0
        %624 = vdwg.mxu0
        %v625 = vld [vmem:[%s6] sm:$0xf]
        %v626 = vld [vmem:[%s6 + $0x4] sm:$0xf]
        %v627 = vld [vmem:[%s6 + $0x8] sm:$0xf]
        %v628 = vld [vmem:[%s6 + $0xc] sm:$0xf]
        %v629 = vld [vmem:[%s7] sm:$0x1]
        %v631 = vlaneseq
        %v632 = vshrl.u32 %v631, 7
        %v633 = vsub.s32 0, %v632
        %v634 = vrot.slane %v629, %v633
        %v640 = vunpack.c.l.b16 %v625
        %v641 = vunpack.c.l.b16 %v626
        %v642 = vunpack.c.l.b16 %v627
        %v643 = vunpack.c.l.b16 %v628
        %v644 = vpack.c.b16 %v641, %v640
        %v645 = vpack.c.b16 %v643, %v642
        %v649 = vsel %vm581, %v556, 0
        %651 = vmatprep.subr.bf16.mxu0 0
        %652 = vmatpush1.bf16.msra.mxu0 %v644
        %653 = vmatprep.subr.bf16.mxu0 0
        %654 = vmatpush1.bf16.msra.mxu0 %v645
        %655 = vmatprep.subr.bf16.mxu0 0
        %656 = vmatpush1.bf16.msra.mxu0 0
        %657 = vmatprep.subr.bf16.mxu0 0
        %658 = vmatpush1.bf16.msra.mxu0 0
        %659 = vmatprep.subr.bf16.mxu0 0
        %660 = vmatpush1.bf16.msra.mxu0 0
        %661 = vmatprep.subr.bf16.mxu0 0
        %662 = vmatpush1.bf16.msra.mxu0 0
        %663 = vmatprep.subr.bf16.mxu0 0
        %664 = vmatpush1.bf16.msra.mxu0 0
        %665 = vmatprep.subr.bf16.mxu0 0
        %666 = vmatpush1.bf16.msra.mxu0 0
        %667 = vmatprep.subr.bf16.mxu0 0
        %668 = vmatpush1.bf16.msra.mxu0 0
        %669 = vmatprep.subr.bf16.mxu0 0
        %670 = vmatpush1.bf16.msra.mxu0 0
        %671 = vmatprep.subr.bf16.mxu0 0
        %672 = vmatpush1.bf16.msra.mxu0 0
        %673 = vmatprep.subr.bf16.mxu0 0
        %674 = vmatpush1.bf16.msra.mxu0 0
        %675 = vmatprep.subr.bf16.mxu0 0
        %676 = vmatpush1.bf16.msra.mxu0 0
        %677 = vmatprep.subr.bf16.mxu0 0
        %678 = vmatpush1.bf16.msra.mxu0 0
        %679 = vmatprep.subr.bf16.mxu0 0
        %680 = vmatpush1.bf16.msra.mxu0 0
        %681 = vmatprep.subr.bf16.mxu0 0
        %682 = vmatpush1.bf16.msra.mxu0 0
        %683 = vmatprep.mubr.bf16.mxu0 0
        %684 = vmatmul.mubr.bf16.gmra.mrb[0].mxu0 %v649
        %v685 = vpop.f32.mrb[0].mxu0
        %v686 = vadd.f32 %v634, %v685
        %v687 = vpop.f32.mrb[0].mxu0
        %v688 = vpop.f32.mrb[0].mxu0
        %v689 = vpop.f32.mrb[0].mxu0
        %690 = vdwg.mxu0
        %v691 = vld [vmem:[#allocation11] sm:$0xf]
        %v692 = vld [vmem:[#allocation11 + $0x4] sm:$0xf]
        %v693 = vld [vmem:[#allocation11 + $0x8] sm:$0xf]
        %v694 = vld [vmem:[#allocation11 + $0xc] sm:$0xf]
        %v695 = vld [vmem:[#allocation13] sm:$0x1]
        %v697 = vlaneseq
        %v698 = vshrl.u32 %v697, 7
        %v699 = vsub.s32 0, %v698
        %v700 = vrot.slane %v695, %v699
        %v706 = vunpack.c.l.b16 %v691
        %v707 = vunpack.c.l.b16 %v692
        %v708 = vunpack.c.l.b16 %v693
        %v709 = vunpack.c.l.b16 %v694
        %v710 = vpack.c.b16 %v707, %v706
        %v711 = vpack.c.b16 %v709, %v708
        %v715 = vsel %vm581, %v557, 0
        %717 = vmatprep.subr.bf16.mxu0 0
        %718 = vmatpush1.bf16.msra.mxu0 %v710
        %719 = vmatprep.subr.bf16.mxu0 0
        %720 = vmatpush1.bf16.msra.mxu0 %v711
        %721 = vmatprep.subr.bf16.mxu0 0
        %722 = vmatpush1.bf16.msra.mxu0 0
        %723 = vmatprep.subr.bf16.mxu0 0
        %724 = vmatpush1.bf16.msra.mxu0 0
        %725 = vmatprep.subr.bf16.mxu0 0
        %726 = vmatpush1.bf16.msra.mxu0 0
        %727 = vmatprep.subr.bf16.mxu0 0
        %728 = vmatpush1.bf16.msra.mxu0 0
        %729 = vmatprep.subr.bf16.mxu0 0
        %730 = vmatpush1.bf16.msra.mxu0 0
        %731 = vmatprep.subr.bf16.mxu0 0
        %732 = vmatpush1.bf16.msra.mxu0 0
        %733 = vmatprep.subr.bf16.mxu0 0
        %734 = vmatpush1.bf16.msra.mxu0 0
        %735 = vmatprep.subr.bf16.mxu0 0
        %736 = vmatpush1.bf16.msra.mxu0 0
        %737 = vmatprep.subr.bf16.mxu0 0
        %738 = vmatpush1.bf16.msra.mxu0 0
        %739 = vmatprep.subr.bf16.mxu0 0
        %740 = vmatpush1.bf16.msra.mxu0 0
        %741 = vmatprep.subr.bf16.mxu0 0
        %742 = vmatpush1.bf16.msra.mxu0 0
        %743 = vmatprep.subr.bf16.mxu0 0
        %744 = vmatpush1.bf16.msra.mxu0 0
        %745 = vmatprep.subr.bf16.mxu0 0
        %746 = vmatpush1.bf16.msra.mxu0 0
        %747 = vmatprep.subr.bf16.mxu0 0
        %748 = vmatpush1.bf16.msra.mxu0 0
        %749 = vmatprep.mubr.bf16.mxu0 0
        %750 = vmatmul.mubr.bf16.gmra.mrb[0].mxu0 %v715
        %v751 = vpop.f32.mrb[0].mxu0
        %v752 = vadd.f32 %v700, %v751
        %v753 = vpop.f32.mrb[0].mxu0
        %v754 = vpop.f32.mrb[0].mxu0
        %v755 = vpop.f32.mrb[0].mxu0
        %756 = vdwg.mxu0
        %v757 = vpack.c.bf16 %v620, %v620
        %v758 = vpack.c.bf16 %v686, %v686
        %v759 = vpack.c.bf16 %v752, %v752
        %v760 = vld [vmem:[%s10] sm:$0xf]
        %v761 = vld [vmem:[%s10 + $0x4] sm:$0xf]
        %v762 = vld [vmem:[%s10 + $0x8] sm:$0xf]
        %v763 = vld [vmem:[%s10 + $0xc] sm:$0xf]
        %v764 = vld [vmem:[#allocation8] sm:$0xff]
        %vm765 = vcmask 64512
        %v767 = vsel %vm765, %v757, 0
        %v770 = vsel %vm765, %v758, 0
        %772 = vmatprep.subr.bf16.mxu0 0
        %773 = vmatpush1.bf16.xpose.msra.mxu0 %v770
        %774 = vmatprep.subr.bf16.mxu0 0
        %775 = vmatpush1.bf16.xpose.msra.mxu0 0
        %776 = vmatprep.subr.bf16.mxu0 0
        %777 = vmatpush1.bf16.xpose.msra.mxu0 0
        %778 = vmatprep.subr.bf16.mxu0 0
        %779 = vmatpush1.bf16.xpose.msra.mxu0 0
        %780 = vmatprep.subr.bf16.mxu0 0
        %781 = vmatpush1.bf16.xpose.msra.mxu0 0
        %782 = vmatprep.subr.bf16.mxu0 0
        %783 = vmatpush1.bf16.xpose.msra.mxu0 0
        %784 = vmatprep.subr.bf16.mxu0 0
        %785 = vmatpush1.bf16.xpose.msra.mxu0 0
        %786 = vmatprep.subr.bf16.mxu0 0
        %787 = vmatpush1.bf16.xpose.msra.mxu0 0
        %788 = vmatprep.subr.bf16.mxu0 0
        %789 = vmatpush1.bf16.xpose.msra.mxu0 0
        %790 = vmatprep.subr.bf16.mxu0 0
        %791 = vmatpush1.bf16.xpose.msra.mxu0 0
        %792 = vmatprep.subr.bf16.mxu0 0
        %793 = vmatpush1.bf16.xpose.msra.mxu0 0
        %794 = vmatprep.subr.bf16.mxu0 0
        %795 = vmatpush1.bf16.xpose.msra.mxu0 0
        %796 = vmatprep.subr.bf16.mxu0 0
        %797 = vmatpush1.bf16.xpose.msra.mxu0 0
        %798 = vmatprep.subr.bf16.mxu0 0
        %799 = vmatpush1.bf16.xpose.msra.mxu0 0
        %800 = vmatprep.subr.bf16.mxu0 0
        %801 = vmatpush1.bf16.xpose.msra.mxu0 0
        %802 = vmatprep.subr.bf16.mxu0 0
        %803 = vmatpush1.bf16.xpose.msra.mxu0 0
        %804 = vmatprep.mubr.bf16.mxu0 0
        %805 = vmatmul.mubr.bf16.gmra.mrb[0].mxu0 %v767
        %v806 = vpop.f32.mrb[0].mxu0
        %v807 = vadd.f32 %v764, %v806
        %v808 = vpop.f32.mrb[0].mxu0
        %v809 = vpop.f32.mrb[0].mxu0
        %v810 = vpop.f32.mrb[0].mxu0
        %811 = vdwg.mxu0
        %v812 = vsel %vm765, %v807, -inf
        %813 = vmax.xlane.f32.xlu0 %v812
        %v814 = vpop.xlane.xlu0 %813
        %v815 = vsub.f32 %v807, %v814
        %v816 = vmul.f32 %v815, 1.442695
        %v817 = vpow.pop %v816
        %v818 = vsel %vm765, %v817, 0.0
        %819 = vadd.xlane.f32.xlu0 %v818
        %v820 = vpop.xlane.xlu0 %819
        %v821 = vrcp.pop %v820
        %v822 = vpack.c.bf16 %v817, %v817
        %v824 = vsel %vm765, %v822, 0
        %vm826 = vcmask 1043456
        %v828 = vsel %vm826, %v759, 0
        %830 = vmatprep.subr.bf16.mxu0 0
        %831 = vmatpush1.bf16.msra.mxu0 %v828
        %832 = vmatprep.subr.bf16.mxu0 0
        %833 = vmatpush1.bf16.msra.mxu0 0
        %834 = vmatprep.subr.bf16.mxu0 0
        %835 = vmatpush1.bf16.msra.mxu0 0
        %836 = vmatprep.subr.bf16.mxu0 0
        %837 = vmatpush1.bf16.msra.mxu0 0
        %838 = vmatprep.subr.bf16.mxu0 0
        %839 = vmatpush1.bf16.msra.mxu0 0
        %840 = vmatprep.subr.bf16.mxu0 0
        %841 = vmatpush1.bf16.msra.mxu0 0
        %842 = vmatprep.subr.bf16.mxu0 0
        %843 = vmatpush1.bf16.msra.mxu0 0
        %844 = vmatprep.subr.bf16.mxu0 0
        %845 = vmatpush1.bf16.msra.mxu0 0
        %846 = vmatprep.subr.bf16.mxu0 0
        %847 = vmatpush1.bf16.msra.mxu0 0
        %848 = vmatprep.subr.bf16.mxu0 0
        %849 = vmatpush1.bf16.msra.mxu0 0
        %850 = vmatprep.subr.bf16.mxu0 0
        %851 = vmatpush1.bf16.msra.mxu0 0
        %852 = vmatprep.subr.bf16.mxu0 0
        %853 = vmatpush1.bf16.msra.mxu0 0
        %854 = vmatprep.subr.bf16.mxu0 0
        %855 = vmatpush1.bf16.msra.mxu0 0
        %856 = vmatprep.subr.bf16.mxu0 0
        %857 = vmatpush1.bf16.msra.mxu0 0
        %858 = vmatprep.subr.bf16.mxu0 0
        %859 = vmatpush1.bf16.msra.mxu0 0
        %860 = vmatprep.subr.bf16.mxu0 0
        %861 = vmatpush1.bf16.msra.mxu0 0
        %862 = vmatprep.mubr.bf16.mxu0 0
        %863 = vmatmul.mubr.bf16.gmra.mrb[0].mxu0 %v824
        %v864 = vpop.f32.mrb[0].mxu0
        %v865 = vadd.f32 0.0, %v864
        %v866 = vpop.f32.mrb[0].mxu0
        %v867 = vpop.f32.mrb[0].mxu0
        %v868 = vpop.f32.mrb[0].mxu0
        %869 = vdwg.mxu0
        %v870 = vmul.f32 %v865, %v821
        %v871 = vpack.c.bf16 %v870, %v870
        %873 = vrot.lane.b32.xlu0 %v757, 120
        %v874 = vpop.permute.xlu0 %873
        %876 = vrot.lane.b32.xlu0 %v758, 120
        %v877 = vpop.permute.xlu0 %876
        %v879 = vsel %vm765, %v874, 0
        %v882 = vsel %vm765, %v877, 0
        %884 = vmatprep.subr.bf16.mxu0 0
        %885 = vmatpush1.bf16.xpose.msra.mxu0 %v882
        %886 = vmatprep.subr.bf16.mxu0 0
        %887 = vmatpush1.bf16.xpose.msra.mxu0 0
        %888 = vmatprep.subr.bf16.mxu0 0
        %889 = vmatpush1.bf16.xpose.msra.mxu0 0
        %890 = vmatprep.subr.bf16.mxu0 0
        %891 = vmatpush1.bf16.xpose.msra.mxu0 0
        %892 = vmatprep.subr.bf16.mxu0 0
        %893 = vmatpush1.bf16.xpose.msra.mxu0 0
        %894 = vmatprep.subr.bf16.mxu0 0
        %895 = vmatpush1.bf16.xpose.msra.mxu0 0
        %896 = vmatprep.subr.bf16.mxu0 0
        %897 = vmatpush1.bf16.xpose.msra.mxu0 0
        %898 = vmatprep.subr.bf16.mxu0 0
        %899 = vmatpush1.bf16.xpose.msra.mxu0 0
        %900 = vmatprep.subr.bf16.mxu0 0
        %901 = vmatpush1.bf16.xpose.msra.mxu0 0
        %902 = vmatprep.subr.bf16.mxu0 0
        %903 = vmatpush1.bf16.xpose.msra.mxu0 0
        %904 = vmatprep.subr.bf16.mxu0 0
        %905 = vmatpush1.bf16.xpose.msra.mxu0 0
        %906 = vmatprep.subr.bf16.mxu0 0
        %907 = vmatpush1.bf16.xpose.msra.mxu0 0
        %908 = vmatprep.subr.bf16.mxu0 0
        %909 = vmatpush1.bf16.xpose.msra.mxu0 0
        %910 = vmatprep.subr.bf16.mxu0 0
        %911 = vmatpush1.bf16.xpose.msra.mxu0 0
        %912 = vmatprep.subr.bf16.mxu0 0
        %913 = vmatpush1.bf16.xpose.msra.mxu0 0
        %914 = vmatprep.subr.bf16.mxu0 0
        %915 = vmatpush1.bf16.xpose.msra.mxu0 0
        %916 = vmatprep.mubr.bf16.mxu0 0
        %917 = vmatmul.mubr.bf16.gmra.mrb[0].mxu0 %v879
        %v918 = vpop.f32.mrb[0].mxu0
        %v919 = vadd.f32 %v764, %v918
        %v920 = vpop.f32.mrb[0].mxu0
        %v921 = vpop.f32.mrb[0].mxu0
        %v922 = vpop.f32.mrb[0].mxu0
        %923 = vdwg.mxu0
        %v924 = vsel %vm765, %v919, -inf
        %925 = vmax.xlane.f32.xlu0 %v924
        %v926 = vpop.xlane.xlu0 %925
        %v927 = vsub.f32 %v919, %v926
        %v928 = vmul.f32 %v927, 1.442695
        %v929 = vpow.pop %v928
        %v930 = vsel %vm765, %v929, 0.0
        %931 = vadd.xlane.f32.xlu0 %v930
        %v932 = vpop.xlane.xlu0 %931
        %v933 = vrcp.pop %v932
        %v934 = vpack.c.bf16 %v929, %v929
        %936 = vrot.lane.b32.xlu0 %v759, 120
        %v937 = vpop.permute.xlu0 %936
        %v939 = vsel %vm765, %v934, 0
        %v942 = vsel %vm826, %v937, 0
        %944 = vmatprep.subr.bf16.mxu0 0
        %945 = vmatpush1.bf16.msra.mxu0 %v942
        %946 = vmatprep.subr.bf16.mxu0 0
        %947 = vmatpush1.bf16.msra.mxu0 0
        %948 = vmatprep.subr.bf16.mxu0 0
        %949 = vmatpush1.bf16.msra.mxu0 0
        %950 = vmatprep.subr.bf16.mxu0 0
        %951 = vmatpush1.bf16.msra.mxu0 0
        %952 = vmatprep.subr.bf16.mxu0 0
        %953 = vmatpush1.bf16.msra.mxu0 0
        %954 = vmatprep.subr.bf16.mxu0 0
        %955 = vmatpush1.bf16.msra.mxu0 0
        %956 = vmatprep.subr.bf16.mxu0 0
        %957 = vmatpush1.bf16.msra.mxu0 0
        %958 = vmatprep.subr.bf16.mxu0 0
        %959 = vmatpush1.bf16.msra.mxu0 0
        %960 = vmatprep.subr.bf16.mxu0 0
        %961 = vmatpush1.bf16.msra.mxu0 0
        %962 = vmatprep.subr.bf16.mxu0 0
        %963 = vmatpush1.bf16.msra.mxu0 0
        %964 = vmatprep.subr.bf16.mxu0 0
        %965 = vmatpush1.bf16.msra.mxu0 0
        %966 = vmatprep.subr.bf16.mxu0 0
        %967 = vmatpush1.bf16.msra.mxu0 0
        %968 = vmatprep.subr.bf16.mxu0 0
        %969 = vmatpush1.bf16.msra.mxu0 0
        %970 = vmatprep.subr.bf16.mxu0 0
        %971 = vmatpush1.bf16.msra.mxu0 0
        %972 = vmatprep.subr.bf16.mxu0 0
        %973 = vmatpush1.bf16.msra.mxu0 0
        %974 = vmatprep.subr.bf16.mxu0 0
        %975 = vmatpush1.bf16.msra.mxu0 0
        %976 = vmatprep.mubr.bf16.mxu0 0
        %977 = vmatmul.mubr.bf16.gmra.mrb[0].mxu0 %v939
        %v978 = vpop.f32.mrb[0].mxu0
        %v979 = vadd.f32 0.0, %v978
        %v980 = vpop.f32.mrb[0].mxu0
        %v981 = vpop.f32.mrb[0].mxu0
        %v982 = vpop.f32.mrb[0].mxu0
        %983 = vdwg.mxu0
        %v984 = vmul.f32 %v979, %v933
        %v985 = vpack.c.bf16 %v984, %v984
        %v987 = vsel %vm765, %v985, 0
        %v990 = vsel %vm826, %v761, 0
        %992 = vmatprep.subr.bf16.mxu0 0
        %993 = vmatpush1.bf16.msra.mxu0 %v990
        %994 = vmatprep.subr.bf16.mxu0 0
        %995 = vmatpush1.bf16.msra.mxu0 0
        %996 = vmatprep.subr.bf16.mxu0 0
        %997 = vmatpush1.bf16.msra.mxu0 0
        %998 = vmatprep.subr.bf16.mxu0 0
        %999 = vmatpush1.bf16.msra.mxu0 0
        %1000 = vmatprep.subr.bf16.mxu0 0
        %1001 = vmatpush1.bf16.msra.mxu0 0
        %1002 = vmatprep.subr.bf16.mxu0 0
        %1003 = vmatpush1.bf16.msra.mxu0 0
        %1004 = vmatprep.subr.bf16.mxu0 0
        %1005 = vmatpush1.bf16.msra.mxu0 0
        %1006 = vmatprep.subr.bf16.mxu0 0
        %1007 = vmatpush1.bf16.msra.mxu0 0
        %1008 = vmatprep.subr.bf16.mxu0 0
        %1009 = vmatpush1.bf16.msra.mxu0 0
        %1010 = vmatprep.subr.bf16.mxu0 0
        %1011 = vmatpush1.bf16.msra.mxu0 0
        %1012 = vmatprep.subr.bf16.mxu0 0
        %1013 = vmatpush1.bf16.msra.mxu0 0
        %1014 = vmatprep.subr.bf16.mxu0 0
        %1015 = vmatpush1.bf16.msra.mxu0 0
        %1016 = vmatprep.subr.bf16.mxu0 0
        %1017 = vmatpush1.bf16.msra.mxu0 0
        %1018 = vmatprep.subr.bf16.mxu0 0
        %1019 = vmatpush1.bf16.msra.mxu0 0
        %1020 = vmatprep.subr.bf16.mxu0 0
        %1021 = vmatpush1.bf16.msra.mxu0 0
        %1022 = vmatprep.subr.bf16.mxu0 0
        %1023 = vmatpush1.bf16.msra.mxu0 0
        %1024 = vmatprep.mubr.bf16.mxu0 0
        %1025 = vmatmul.mubr.bf16.gmra.mrb[0].mxu0 %v987
        %v1026 = vpop.f32.mrb[0].mxu0
        %v1027 = vadd.f32 0.0, %v1026
        %v1028 = vpop.f32.mrb[0].mxu0
        %v1029 = vpop.f32.mrb[0].mxu0
        %v1030 = vpop.f32.mrb[0].mxu0
        %1031 = vdwg.mxu0
        %v1033 = vsel %vm765, %v871, 0
        %v1036 = vsel %vm826, %v760, 0
        %1038 = vmatprep.subr.bf16.mxu0 0
        %1039 = vmatpush1.bf16.msra.mxu0 %v1036
        %1040 = vmatprep.subr.bf16.mxu0 0
        %1041 = vmatpush1.bf16.msra.mxu0 0
        %1042 = vmatprep.subr.bf16.mxu0 0
        %1043 = vmatpush1.bf16.msra.mxu0 0
        %1044 = vmatprep.subr.bf16.mxu0 0
        %1045 = vmatpush1.bf16.msra.mxu0 0
        %1046 = vmatprep.subr.bf16.mxu0 0
        %1047 = vmatpush1.bf16.msra.mxu0 0
        %1048 = vmatprep.subr.bf16.mxu0 0
        %1049 = vmatpush1.bf16.msra.mxu0 0
        %1050 = vmatprep.subr.bf16.mxu0 0
        %1051 = vmatpush1.bf16.msra.mxu0 0
        %1052 = vmatprep.subr.bf16.mxu0 0
        %1053 = vmatpush1.bf16.msra.mxu0 0
        %1054 = vmatprep.subr.bf16.mxu0 0
        %1055 = vmatpush1.bf16.msra.mxu0 0
        %1056 = vmatprep.subr.bf16.mxu0 0
        %1057 = vmatpush1.bf16.msra.mxu0 0
        %1058 = vmatprep.subr.bf16.mxu0 0
        %1059 = vmatpush1.bf16.msra.mxu0 0
        %1060 = vmatprep.subr.bf16.mxu0 0
        %1061 = vmatpush1.bf16.msra.mxu0 0
        %1062 = vmatprep.subr.bf16.mxu0 0
        %1063 = vmatpush1.bf16.msra.mxu0 0
        %1064 = vmatprep.subr.bf16.mxu0 0
        %1065 = vmatpush1.bf16.msra.mxu0 0
        %1066 = vmatprep.subr.bf16.mxu0 0
        %1067 = vmatpush1.bf16.msra.mxu0 0
        %1068 = vmatprep.subr.bf16.mxu0 0
        %1069 = vmatpush1.bf16.msra.mxu0 0
        %1070 = vmatprep.mubr.bf16.mxu0 0
        %1071 = vmatmul.mubr.bf16.gmra.mrb[0].mxu0 %v1033
        %v1072 = vpop.f32.mrb[0].mxu0
        %v1073 = vadd.f32 %v1027, %v1072
        %v1074 = vpop.f32.mrb[0].mxu0
        %v1075 = vpop.f32.mrb[0].mxu0
        %v1076 = vpop.f32.mrb[0].mxu0
        %1077 = vdwg.mxu0
        %1078 = vrot.lane.b32.xlu0 %v757, 112
        %v1079 = vpop.permute.xlu0 %1078
        %1080 = vrot.lane.b32.xlu0 %v758, 112
        %v1081 = vpop.permute.xlu0 %1080
        %v1083 = vsel %vm765, %v1079, 0
        %v1086 = vsel %vm765, %v1081, 0
        %1088 = vmatprep.subr.bf16.mxu0 0
        %1089 = vmatpush1.bf16.xpose.msra.mxu0 %v1086
        %1090 = vmatprep.subr.bf16.mxu0 0
        %1091 = vmatpush1.bf16.xpose.msra.mxu0 0
        %1092 = vmatprep.subr.bf16.mxu0 0
        %1093 = vmatpush1.bf16.xpose.msra.mxu0 0
        %1094 = vmatprep.subr.bf16.mxu0 0
        %1095 = vmatpush1.bf16.xpose.msra.mxu0 0
        %1096 = vmatprep.subr.bf16.mxu0 0
        %1097 = vmatpush1.bf16.xpose.msra.mxu0 0
        %1098 = vmatprep.subr.bf16.mxu0 0
        %1099 = vmatpush1.bf16.xpose.msra.mxu0 0
        %1100 = vmatprep.subr.bf16.mxu0 0
        %1101 = vmatpush1.bf16.xpose.msra.mxu0 0
        %1102 = vmatprep.subr.bf16.mxu0 0
        %1103 = vmatpush1.bf16.xpose.msra.mxu0 0
        %1104 = vmatprep.subr.bf16.mxu0 0
        %1105 = vmatpush1.bf16.xpose.msra.mxu0 0
        %1106 = vmatprep.subr.bf16.mxu0 0
        %1107 = vmatpush1.bf16.xpose.msra.mxu0 0
        %1108 = vmatprep.subr.bf16.mxu0 0
        %1109 = vmatpush1.bf16.xpose.msra.mxu0 0
        %1110 = vmatprep.subr.bf16.mxu0 0
        %1111 = vmatpush1.bf16.xpose.msra.mxu0 0
        %1112 = vmatprep.subr.bf16.mxu0 0
        %1113 = vmatpush1.bf16.xpose.msra.mxu0 0
        %1114 = vmatprep.subr.bf16.mxu0 0
        %1115 = vmatpush1.bf16.xpose.msra.mxu0 0
        %1116 = vmatprep.subr.bf16.mxu0 0
        %1117 = vmatpush1.bf16.xpose.msra.mxu0 0
        %1118 = vmatprep.subr.bf16.mxu0 0
        %1119 = vmatpush1.bf16.xpose.msra.mxu0 0
        %1120 = vmatprep.mubr.bf16.mxu0 0
        %1121 = vmatmul.mubr.bf16.gmra.mrb[0].mxu0 %v1083
        %v1122 = vpop.f32.mrb[0].mxu0
        %v1123 = vadd.f32 %v764, %v1122
        %v1124 = vpop.f32.mrb[0].mxu0
        %v1125 = vpop.f32.mrb[0].mxu0
        %v1126 = vpop.f32.mrb[0].mxu0
        %1127 = vdwg.mxu0
        %v1128 = vsel %vm765, %v1123, -inf
        %1129 = vmax.xlane.f32.xlu0 %v1128
        %v1130 = vpop.xlane.xlu0 %1129
        %v1131 = vsub.f32 %v1123, %v1130
        %v1132 = vmul.f32 %v1131, 1.442695
        %v1133 = vpow.pop %v1132
        %v1134 = vsel %vm765, %v1133, 0.0
        %1135 = vadd.xlane.f32.xlu0 %v1134
        %v1136 = vpop.xlane.xlu0 %1135
        %v1137 = vrcp.pop %v1136
        %v1138 = vpack.c.bf16 %v1133, %v1133
        %1139 = vrot.lane.b32.xlu0 %v759, 112
        %v1140 = vpop.permute.xlu0 %1139
        %v1142 = vsel %vm765, %v1138, 0
        %v1145 = vsel %vm826, %v1140, 0
        %1147 = vmatprep.subr.bf16.mxu0 0
        %1148 = vmatpush1.bf16.msra.mxu0 %v1145
        %1149 = vmatprep.subr.bf16.mxu0 0
        %1150 = vmatpush1.bf16.msra.mxu0 0
        %1151 = vmatprep.subr.bf16.mxu0 0
        %1152 = vmatpush1.bf16.msra.mxu0 0
        %1153 = vmatprep.subr.bf16.mxu0 0
        %1154 = vmatpush1.bf16.msra.mxu0 0
        %1155 = vmatprep.subr.bf16.mxu0 0
        %1156 = vmatpush1.bf16.msra.mxu0 0
        %1157 = vmatprep.subr.bf16.mxu0 0
        %1158 = vmatpush1.bf16.msra.mxu0 0
        %1159 = vmatprep.subr.bf16.mxu0 0
        %1160 = vmatpush1.bf16.msra.mxu0 0
        %1161 = vmatprep.subr.bf16.mxu0 0
        %1162 = vmatpush1.bf16.msra.mxu0 0
        %1163 = vmatprep.subr.bf16.mxu0 0
        %1164 = vmatpush1.bf16.msra.mxu0 0
        %1165 = vmatprep.subr.bf16.mxu0 0
        %1166 = vmatpush1.bf16.msra.mxu0 0
        %1167 = vmatprep.subr.bf16.mxu0 0
        %1168 = vmatpush1.bf16.msra.mxu0 0
        %1169 = vmatprep.subr.bf16.mxu0 0
        %1170 = vmatpush1.bf16.msra.mxu0 0
        %1171 = vmatprep.subr.bf16.mxu0 0
        %1172 = vmatpush1.bf16.msra.mxu0 0
        %1173 = vmatprep.subr.bf16.mxu0 0
        %1174 = vmatpush1.bf16.msra.mxu0 0
        %1175 = vmatprep.subr.bf16.mxu0 0
        %1176 = vmatpush1.bf16.msra.mxu0 0
        %1177 = vmatprep.subr.bf16.mxu0 0
        %1178 = vmatpush1.bf16.msra.mxu0 0
        %1179 = vmatprep.mubr.bf16.mxu0 0
        %1180 = vmatmul.mubr.bf16.gmra.mrb[0].mxu0 %v1142
        %v1181 = vpop.f32.mrb[0].mxu0
        %v1182 = vadd.f32 0.0, %v1181
        %v1183 = vpop.f32.mrb[0].mxu0
        %v1184 = vpop.f32.mrb[0].mxu0
        %v1185 = vpop.f32.mrb[0].mxu0
        %1186 = vdwg.mxu0
        %v1187 = vmul.f32 %v1182, %v1137
        %v1188 = vpack.c.bf16 %v1187, %v1187
        %v1190 = vsel %vm765, %v1188, 0
        %v1193 = vsel %vm826, %v762, 0
        %1195 = vmatprep.subr.bf16.mxu0 0
        %1196 = vmatpush1.bf16.msra.mxu0 %v1193
        %1197 = vmatprep.subr.bf16.mxu0 0
        %1198 = vmatpush1.bf16.msra.mxu0 0
        %1199 = vmatprep.subr.bf16.mxu0 0
        %1200 = vmatpush1.bf16.msra.mxu0 0
        %1201 = vmatprep.subr.bf16.mxu0 0
        %1202 = vmatpush1.bf16.msra.mxu0 0
        %1203 = vmatprep.subr.bf16.mxu0 0
        %1204 = vmatpush1.bf16.msra.mxu0 0
        %1205 = vmatprep.subr.bf16.mxu0 0
        %1206 = vmatpush1.bf16.msra.mxu0 0
        %1207 = vmatprep.subr.bf16.mxu0 0
        %1208 = vmatpush1.bf16.msra.mxu0 0
        %1209 = vmatprep.subr.bf16.mxu0 0
        %1210 = vmatpush1.bf16.msra.mxu0 0
        %1211 = vmatprep.subr.bf16.mxu0 0
        %1212 = vmatpush1.bf16.msra.mxu0 0
        %1213 = vmatprep.subr.bf16.mxu0 0
        %1214 = vmatpush1.bf16.msra.mxu0 0
        %1215 = vmatprep.subr.bf16.mxu0 0
        %1216 = vmatpush1.bf16.msra.mxu0 0
        %1217 = vmatprep.subr.bf16.mxu0 0
        %1218 = vmatpush1.bf16.msra.mxu0 0
        %1219 = vmatprep.subr.bf16.mxu0 0
        %1220 = vmatpush1.bf16.msra.mxu0 0
        %1221 = vmatprep.subr.bf16.mxu0 0
        %1222 = vmatpush1.bf16.msra.mxu0 0
        %1223 = vmatprep.subr.bf16.mxu0 0
        %1224 = vmatpush1.bf16.msra.mxu0 0
        %1225 = vmatprep.subr.bf16.mxu0 0
        %1226 = vmatpush1.bf16.msra.mxu0 0
        %1227 = vmatprep.mubr.bf16.mxu0 0
        %1228 = vmatmul.mubr.bf16.gmra.mrb[0].mxu0 %v1190
        %v1229 = vpop.f32.mrb[0].mxu0
        %v1230 = vadd.f32 0.0, %v1229
        %v1231 = vpop.f32.mrb[0].mxu0
        %v1232 = vpop.f32.mrb[0].mxu0
        %v1233 = vpop.f32.mrb[0].mxu0
        %1234 = vdwg.mxu0
        %v1235 = vadd.f32 %v1073, %v1230
        %1236 = vrot.lane.b32.xlu0 %v757, 104
        %v1237 = vpop.permute.xlu0 %1236
        %1238 = vrot.lane.b32.xlu0 %v758, 104
        %v1239 = vpop.permute.xlu0 %1238
        %v1241 = vsel %vm765, %v1237, 0
        %v1244 = vsel %vm765, %v1239, 0
        %1246 = vmatprep.subr.bf16.mxu0 0
        %1247 = vmatpush1.bf16.xpose.msra.mxu0 %v1244
        %1248 = vmatprep.subr.bf16.mxu0 0
        %1249 = vmatpush1.bf16.xpose.msra.mxu0 0
        %1250 = vmatprep.subr.bf16.mxu0 0
        %1251 = vmatpush1.bf16.xpose.msra.mxu0 0
        %1252 = vmatprep.subr.bf16.mxu0 0
        %1253 = vmatpush1.bf16.xpose.msra.mxu0 0
        %1254 = vmatprep.subr.bf16.mxu0 0
        %1255 = vmatpush1.bf16.xpose.msra.mxu0 0
        %1256 = vmatprep.subr.bf16.mxu0 0
        %1257 = vmatpush1.bf16.xpose.msra.mxu0 0
        %1258 = vmatprep.subr.bf16.mxu0 0
        %1259 = vmatpush1.bf16.xpose.msra.mxu0 0
        %1260 = vmatprep.subr.bf16.mxu0 0
        %1261 = vmatpush1.bf16.xpose.msra.mxu0 0
        %1262 = vmatprep.subr.bf16.mxu0 0
        %1263 = vmatpush1.bf16.xpose.msra.mxu0 0
        %1264 = vmatprep.subr.bf16.mxu0 0
        %1265 = vmatpush1.bf16.xpose.msra.mxu0 0
        %1266 = vmatprep.subr.bf16.mxu0 0
        %1267 = vmatpush1.bf16.xpose.msra.mxu0 0
        %1268 = vmatprep.subr.bf16.mxu0 0
        %1269 = vmatpush1.bf16.xpose.msra.mxu0 0
        %1270 = vmatprep.subr.bf16.mxu0 0
        %1271 = vmatpush1.bf16.xpose.msra.mxu0 0
        %1272 = vmatprep.subr.bf16.mxu0 0
        %1273 = vmatpush1.bf16.xpose.msra.mxu0 0
        %1274 = vmatprep.subr.bf16.mxu0 0
        %1275 = vmatpush1.bf16.xpose.msra.mxu0 0
        %1276 = vmatprep.subr.bf16.mxu0 0
        %1277 = vmatpush1.bf16.xpose.msra.mxu0 0
        %1278 = vmatprep.mubr.bf16.mxu0 0
        %1279 = vmatmul.mubr.bf16.gmra.mrb[0].mxu0 %v1241
        %v1280 = vpop.f32.mrb[0].mxu0
        %v1281 = vadd.f32 %v764, %v1280
        %v1282 = vpop.f32.mrb[0].mxu0
        %v1283 = vpop.f32.mrb[0].mxu0
        %v1284 = vpop.f32.mrb[0].mxu0
        %1285 = vdwg.mxu0
        %v1286 = vsel %vm765, %v1281, -inf
        %1287 = vmax.xlane.f32.xlu0 %v1286
        %v1288 = vpop.xlane.xlu0 %1287
        %v1289 = vsub.f32 %v1281, %v1288
        %v1290 = vmul.f32 %v1289, 1.442695
        %v1291 = vpow.pop %v1290
        %v1292 = vsel %vm765, %v1291, 0.0
        %1293 = vadd.xlane.f32.xlu0 %v1292
        %v1294 = vpop.xlane.xlu0 %1293
        %v1295 = vrcp.pop %v1294
        %v1296 = vpack.c.bf16 %v1291, %v1291
        %1297 = vrot.lane.b32.xlu0 %v759, 104
        %v1298 = vpop.permute.xlu0 %1297
        %v1300 = vsel %vm765, %v1296, 0
        %v1303 = vsel %vm826, %v1298, 0
        %1305 = vmatprep.subr.bf16.mxu0 0
        %1306 = vmatpush1.bf16.msra.mxu0 %v1303
        %1307 = vmatprep.subr.bf16.mxu0 0
        %1308 = vmatpush1.bf16.msra.mxu0 0
        %1309 = vmatprep.subr.bf16.mxu0 0
        %1310 = vmatpush1.bf16.msra.mxu0 0
        %1311 = vmatprep.subr.bf16.mxu0 0
        %1312 = vmatpush1.bf16.msra.mxu0 0
        %1313 = vmatprep.subr.bf16.mxu0 0
        %1314 = vmatpush1.bf16.msra.mxu0 0
        %1315 = vmatprep.subr.bf16.mxu0 0
        %1316 = vmatpush1.bf16.msra.mxu0 0
        %1317 = vmatprep.subr.bf16.mxu0 0
        %1318 = vmatpush1.bf16.msra.mxu0 0
        %1319 = vmatprep.subr.bf16.mxu0 0
        %1320 = vmatpush1.bf16.msra.mxu0 0
        %1321 = vmatprep.subr.bf16.mxu0 0
        %1322 = vmatpush1.bf16.msra.mxu0 0
        %1323 = vmatprep.subr.bf16.mxu0 0
        %1324 = vmatpush1.bf16.msra.mxu0 0
        %1325 = vmatprep.subr.bf16.mxu0 0
        %1326 = vmatpush1.bf16.msra.mxu0 0
        %1327 = vmatprep.subr.bf16.mxu0 0
        %1328 = vmatpush1.bf16.msra.mxu0 0
        %1329 = vmatprep.subr.bf16.mxu0 0
        %1330 = vmatpush1.bf16.msra.mxu0 0
        %1331 = vmatprep.subr.bf16.mxu0 0
        %1332 = vmatpush1.bf16.msra.mxu0 0
        %1333 = vmatprep.subr.bf16.mxu0 0
        %1334 = vmatpush1.bf16.msra.mxu0 0
        %1335 = vmatprep.subr.bf16.mxu0 0
        %1336 = vmatpush1.bf16.msra.mxu0 0
        %1337 = vmatprep.mubr.bf16.mxu0 0
        %1338 = vmatmul.mubr.bf16.gmra.mrb[0].mxu0 %v1300
        %v1339 = vpop.f32.mrb[0].mxu0
        %v1340 = vadd.f32 0.0, %v1339
        %v1341 = vpop.f32.mrb[0].mxu0
        %v1342 = vpop.f32.mrb[0].mxu0
        %v1343 = vpop.f32.mrb[0].mxu0
        %1344 = vdwg.mxu0
        %v1345 = vmul.f32 %v1340, %v1295
        %v1346 = vpack.c.bf16 %v1345, %v1345
        %v1348 = vsel %vm765, %v1346, 0
        %v1351 = vsel %vm826, %v763, 0
        %1353 = vmatprep.subr.bf16.mxu0 0
        %1354 = vmatpush1.bf16.msra.mxu0 %v1351
        %1355 = vmatprep.subr.bf16.mxu0 0
        %1356 = vmatpush1.bf16.msra.mxu0 0
        %1357 = vmatprep.subr.bf16.mxu0 0
        %1358 = vmatpush1.bf16.msra.mxu0 0
        %1359 = vmatprep.subr.bf16.mxu0 0
        %1360 = vmatpush1.bf16.msra.mxu0 0
        %1361 = vmatprep.subr.bf16.mxu0 0
        %1362 = vmatpush1.bf16.msra.mxu0 0
        %1363 = vmatprep.subr.bf16.mxu0 0
        %1364 = vmatpush1.bf16.msra.mxu0 0
        %1365 = vmatprep.subr.bf16.mxu0 0
        %1366 = vmatpush1.bf16.msra.mxu0 0
        %1367 = vmatprep.subr.bf16.mxu0 0
        %1368 = vmatpush1.bf16.msra.mxu0 0
        %1369 = vmatprep.subr.bf16.mxu0 0
        %1370 = vmatpush1.bf16.msra.mxu0 0
        %1371 = vmatprep.subr.bf16.mxu0 0
        %1372 = vmatpush1.bf16.msra.mxu0 0
        %1373 = vmatprep.subr.bf16.mxu0 0
        %1374 = vmatpush1.bf16.msra.mxu0 0
        %1375 = vmatprep.subr.bf16.mxu0 0
        %1376 = vmatpush1.bf16.msra.mxu0 0
        %1377 = vmatprep.subr.bf16.mxu0 0
        %1378 = vmatpush1.bf16.msra.mxu0 0
        %1379 = vmatprep.subr.bf16.mxu0 0
        %1380 = vmatpush1.bf16.msra.mxu0 0
        %1381 = vmatprep.subr.bf16.mxu0 0
        %1382 = vmatpush1.bf16.msra.mxu0 0
        %1383 = vmatprep.subr.bf16.mxu0 0
        %1384 = vmatpush1.bf16.msra.mxu0 0
        %1385 = vmatprep.mubr.bf16.mxu0 0
        %1386 = vmatmul.mubr.bf16.gmra.mrb[0].mxu0 %v1348
        %v1387 = vpop.f32.mrb[0].mxu0
        %v1388 = vadd.f32 0.0, %v1387
        %v1389 = vpop.f32.mrb[0].mxu0
        %v1390 = vpop.f32.mrb[0].mxu0
        %v1391 = vpop.f32.mrb[0].mxu0
        %1392 = vdwg.mxu0
        %v1393 = vadd.f32 %v1235, %v1388
        %v1394 = vld [vmem:[%s11] sm:$0x1]
        %v1396 = vlaneseq
        %v1397 = vshrl.u32 %v1396, 7
        %v1398 = vsub.s32 0, %v1397
        %v1399 = vrot.slane %v1394, %v1398
        %v1401 = vadd.f32 %v1393, %v1399
        %1402 = vst.msk [vmem:[%s553] sm:$0xff] %vm581, %v1401
        %s1403 = sand.u32 %s309, 1
        %s1404 = scalar_lea.sflag [#allocation4], %s1403
        %s1405 = sand.u32 %s309, 1
        %s1406 = smul.addr %s1405, 8
        %s1407 = scalar_lea.vmem [#allocation14], %s1406
        // Predicated region
        $region97: #{tpu_custom_call.1} parent=67 // pred_check
          %p1408 = pneg %p319
        $region98: #{tpu_custom_call.1} parent=67 // pred_check_branch
          %1410 = sbr.rel (%p1408) target = $region100
        $region99: #{tpu_custom_call.1} parent=67 // pred_region
          %s1412 = ssub.s32 128, 128
          %1413 = vsyncadd %s1404, %s1412
          %s1414 = smul.addr %s34, 128
          %s1415 = scalar_lea.hbm %s12, %s1414
          %s1417 = sshll.u32 %s1407, 4
          %s1418 = int_to_ptr.vmem [resolvable:$true] %s1417
          %1420 = dma.vmem_to_hbm [thread:$0]  %s1418, 128, %s1415, %s1404
        $region100: #{tpu_custom_call.1} parent=67 // pred_fallthru
          _
      $region68: #{tpu_custom_call.1} parent=5 // pred_fallthru
        _
      %p1421 = scmp.le.s32.totalorder 2, %s29
      // Predicated region
      $region101: #{tpu_custom_call.1} parent=5 // pred_check
        %p1422 = pneg %p1421
      $region102: #{tpu_custom_call.1} parent=5 // pred_check_branch
        %1424 = sbr.rel (%p1422) target = $region104
      $region103: #{tpu_custom_call.1} parent=5 // pred_region
        %s1425 = ssub.s32 %s29, 2
        // Predicated region
        $region105: #{tpu_custom_call.1} parent=103 // pred_check
          %p1426 = pneg %p325
        $region106: #{tpu_custom_call.1} parent=103 // pred_check_branch
          %1428 = sbr.rel (%p1426) target = $region108
        $region107: #{tpu_custom_call.1} parent=103 // pred_region
          %s1429 = sand.u32 %s310, 1
          %s1430 = scalar_lea.sflag [#allocation4], %s1429
          %s1431 = sand.u32 %s310, 1
          %s1432 = smul.addr %s1431, 8
          %s1433 = scalar_lea.vmem [#allocation14], %s1432
          %1434 = dma.done %s1430, 128
        $region108: #{tpu_custom_call.1} parent=103 // pred_fallthru
          _
      $region104: #{tpu_custom_call.1} parent=5 // pred_fallthru
        _
    $region6: #{tpu_custom_call.1} parent=1 // loop_footer
      %s33 = sadd.s32 1, %s29
    $region7: #{tpu_custom_call.1} parent=1 // loop_footer_branch
      %28 = sbr.rel target = $region3
    $region8: #{tpu_custom_call.1} parent=1 // loop_exit
      _
    %1435 = vsyncpa [#allocation3], 1
    %s1436 = scalar_lea.sflag [#allocation3], 1
    %1437 = vsyncpa %s1436, 1
    %1438 = vsyncpa [#allocation6], 1
    %s1439 = scalar_lea.sflag [#allocation6], 1
    %1440 = vsyncpa %s1439, 1
    %1441 = vsyncpa [#allocation9], 1
    %1442 = vsyncpa [#allocation12], 1
    %1443 = vsyncpa [#allocation4], 1
    %s1444 = scalar_lea.sflag [#allocation4], 1
    %1445 = vsyncpa %s1444, 1

</llo_original>
